<compile_context>
chip_gen: v5e
topology: v5e:2x2
jax: 0.10.0
libtpu: 0.0.40
codegen_flags: <defaults>
</compile_context>

<pallas_src>
import functools

import jax
import jax.numpy as jnp
from jax.experimental import pallas as pl
from jax.experimental.pallas import tpu as pltpu


# -----------------------------------------------------------------------------
# Fused Pallas kernel: all LSTM layers + fc head in one call
# -----------------------------------------------------------------------------
def _fused_lstm_fc_kernel(*refs, num_layers, hidden, seq_len, batch):
    """Fused multi-layer LSTM + final Linear.

    refs layout (all VMEM, all pre-laid-out by prepare_params):
      x_ref                       (B, T, I)   batch_first input (as given)
      per layer l:
        wih_l                     (I_l, 4H)   input->gates weight (transposed)
        whh_l                     (H,   4H)   hidden->gates weight (transposed)
        b_l                       (1,   4H)   b_ih + b_hh
      w_fc                        (H, O)
      b_fc                        (1, O)
      out_ref                     (B, O)
    """
    H = hidden
    T = seq_len
    B = batch

    x_ref = refs[0]
    w_refs = refs[1:1 + 3 * num_layers]
    w_fc_ref = refs[1 + 3 * num_layers]
    b_fc_ref = refs[2 + 3 * num_layers]
    out_ref = refs[3 + 3 * num_layers]

    # Time-major flatten of x inside the kernel: row t*B + b == x[b, t, :].
    # Tiny value concat; keeps the wrapper free of a per-call transpose op.
    xin = jnp.concatenate([x_ref[:, t, :] for t in range(T)], axis=0)  # (T*B, I)

    h = jnp.zeros((B, H), jnp.float32)

    for l in range(num_layers):
        wih = w_refs[3 * l][...]          # (I_l, 4H)
        whh = w_refs[3 * l + 1][...]      # (H, 4H)  held in vregs across steps
        b = w_refs[3 * l + 2][...]        # (1, 4H)

        # Hoisted input projection: one tall matmul with no sequential
        # dependency; bias folded in here so it is off the recurrent path.
        xg = jnp.dot(xin, wih, preferred_element_type=jnp.float32) + b  # (T*B, 4H)

        h = jnp.zeros((B, H), jnp.float32)
        c = jnp.zeros((B, H), jnp.float32)
        last_layer = (l == num_layers - 1)
        hs = []

        # T is static and small: fully unroll so the scheduler can overlap
        # step t's elementwise tail with step t+1's h @ W_hh.
        for t in range(T):
            gates = xg[t * B:(t + 1) * B, :] + jnp.dot(
                h, whh, preferred_element_type=jnp.float32)           # (B, 4H)

            # Two full-vreg EUP pushes instead of four sub-slice pushes.
            sg = jax.nn.sigmoid(gates)                                # (B, 4H)
            th = jnp.tanh(gates)                                      # (B, 4H)
            i = sg[:, 0 * H:1 * H]
            f = sg[:, 1 * H:2 * H]
            g = th[:, 2 * H:3 * H]
            o = sg[:, 3 * H:4 * H]

            c = f * c + i * g
            h = o * jnp.tanh(c)

            if not last_layer:
                hs.append(h)
            # Last layer: only the final h is consumed downstream -> skip
            # collecting intermediate states entirely.

        if not last_layer:
            # Inter-layer activations stay in registers ((T*B, H) ~ 2 vregs).
            xin = jnp.concatenate(hs, axis=0)                         # (T*B, H)

    # Fused fc head on the final hidden state of the last layer.
    out_ref[...] = (
        jnp.dot(h, w_fc_ref[...], preferred_element_type=jnp.float32)
        + b_fc_ref[...]
    )


# -----------------------------------------------------------------------------
# One-time parameter prep (hoisted out of the per-call forward)
# -----------------------------------------------------------------------------
def prepare_params(params):
    """Transpose weights / fold biases once, so the forward launches no extra
    XLA ops besides the single pallas_call."""
    prepped = {"layers": []}
    for lp in params["layers"]:
        prepped["layers"].append({
            "w_ih_t": jnp.transpose(lp["w_ih"]),                    # (I_l, 4H)
            "w_hh_t": jnp.transpose(lp["w_hh"]),                    # (H, 4H)
            "b": (lp["b_ih"] + lp["b_hh"]).reshape(1, -1),          # (1, 4H)
        })
    prepped["w_fc_t"] = jnp.transpose(params["w_fc"])               # (H, O)
    prepped["b_fc"] = params["b_fc"].reshape(1, -1)                 # (1, O)
    return jax.tree_util.tree_map(jax.block_until_ready, prepped)


# -----------------------------------------------------------------------------
# Wrapper
# -----------------------------------------------------------------------------
def lstm_forward(x, prepped, hidden):
    """Full module forward: x (B, T, I) -> squeezed prediction."""
    B, T, _ = x.shape
    num_layers = len(prepped["layers"])
    out_size = prepped["w_fc_t"].shape[1]

    inputs = [x]
    for lp in prepped["layers"]:
        inputs.extend([lp["w_ih_t"], lp["w_hh_t"], lp["b"]])
    inputs.append(prepped["w_fc_t"])
    inputs.append(prepped["b_fc"])

    kernel = functools.partial(
        _fused_lstm_fc_kernel,
        num_layers=num_layers, hidden=hidden, seq_len=T, batch=B)

    pred = pl.pallas_call(
        kernel,
        out_shape=jax.ShapeDtypeStruct((B, out_size), jnp.float32),
        in_specs=[pl.BlockSpec(memory_space=pltpu.MemorySpace.VMEM)] * len(inputs),
        out_specs=pl.BlockSpec(memory_space=pltpu.MemorySpace.VMEM),
    )(*inputs)

    return jnp.squeeze(pred)                                # matches pred.squeeze()


# -----------------------------------------------------------------------------
# Deterministic parameter init (PyTorch-style uniform(-1/sqrt(H), 1/sqrt(H)))
# -----------------------------------------------------------------------------
def init_params(key, input_size, hidden, num_layers, output_size):
    k = 1.0 / jnp.sqrt(jnp.float32(hidden))
    params = {"layers": []}
    for layer in range(num_layers):
        in_sz = input_size if layer == 0 else hidden
        key, k1, k2, k3, k4 = jax.random.split(key, 5)
        params["layers"].append({
            "w_ih": jax.random.uniform(k1, (4 * hidden, in_sz), jnp.float32, -k, k),
            "w_hh": jax.random.uniform(k2, (4 * hidden, hidden), jnp.float32, -k, k),
            "b_ih": jax.random.uniform(k3, (4 * hidden,), jnp.float32, -k, k),
            "b_hh": jax.random.uniform(k4, (4 * hidden,), jnp.float32, -k, k),
        })
    key, k1, k2 = jax.random.split(key, 3)
    params["w_fc"] = jax.random.uniform(k1, (output_size, hidden), jnp.float32, -k, k)
    params["b_fc"] = jax.random.uniform(k2, (output_size,), jnp.float32, -k, k)
    return params


# -----------------------------------------------------------------------------
# Pure-JAX reference (for correctness check)
# -----------------------------------------------------------------------------
def lstm_forward_ref(x, params, hidden):
    B = x.shape[0]
    out = x
    for lp in params["layers"]:
        h = jnp.zeros((B, hidden), jnp.float32)
        c = jnp.zeros((B, hidden), jnp.float32)
        ys = []
        for t in range(out.shape[1]):
            gates = out[:, t, :] @ lp["w_ih"].T + h @ lp["w_hh"].T + lp["b_ih"] + lp["b_hh"]
            i = jax.nn.sigmoid(gates[:, 0 * hidden:1 * hidden])
            f = jax.nn.sigmoid(gates[:, 1 * hidden:2 * hidden])
            g = jnp.tanh(gates[:, 2 * hidden:3 * hidden])
            o = jax.nn.sigmoid(gates[:, 3 * hidden:4 * hidden])
            c = f * c + i * g
            h = o * jnp.tanh(c)
            ys.append(h)
        out = jnp.stack(ys, axis=1)
    pred = out[:, -1, :] @ params["w_fc"].T + params["b_fc"]
    return jnp.squeeze(pred)


# -----------------------------------------------------------------------------
if __name__ == "__main__":
    # Small shapes consistent with the module's forward.
    B, T = 2, 8                   # batch, sequence length
    INPUT_SIZE = 4
    HIDDEN = 32
    NUM_LAYERS = 2
    OUTPUT_SIZE = 1
    DROPOUT_RATE = 0.1            # identity at inference

    key = jax.random.PRNGKey(0)
    key, xkey = jax.random.split(key)
    x = jax.random.normal(xkey, (B, T, INPUT_SIZE), jnp.float32)

    params = init_params(key, INPUT_SIZE, HIDDEN, NUM_LAYERS, OUTPUT_SIZE)
    prepped = prepare_params(params)      # one-time, hoisted out of the forward

    pred = lstm_forward(x, prepped, HIDDEN)
    pred = jax.block_until_ready(pred)

    ref = lstm_forward_ref(x, params, HIDDEN)
    assert pred.shape == ref.shape
    assert jnp.allclose(pred, ref, atol=1e-5, rtol=1e-5), (pred, ref)

    print("KERNEL_OK")
</pallas_src>

<mosaic_0001>
module attributes {stable_mosaic.version = 11 : i64} {
  func.func @_fused_lstm_fc_kernel(%arg0: memref<2x8x4xf32, #tpu.memory_space<vmem>>, %arg1: memref<4x128xf32, #tpu.memory_space<vmem>>, %arg2: memref<32x128xf32, #tpu.memory_space<vmem>>, %arg3: memref<1x128xf32, #tpu.memory_space<vmem>>, %arg4: memref<32x128xf32, #tpu.memory_space<vmem>>, %arg5: memref<32x128xf32, #tpu.memory_space<vmem>>, %arg6: memref<1x128xf32, #tpu.memory_space<vmem>>, %arg7: memref<32x1xf32, #tpu.memory_space<vmem>>, %arg8: memref<1x1xf32, #tpu.memory_space<vmem>>, %arg9: memref<2x1xf32, #tpu.memory_space<vmem>>) attributes {dimension_semantics = [], scalar_prefetch = 0 : i64, scratch_operands = 0 : i64, tpu.core_type = #tpu.core_type<tc>} {
    %c0 = arith.constant 0 : index
    %c0_0 = arith.constant 0 : index
    %c0_1 = arith.constant 0 : index
    %0 = vector.load %arg0[%c0, %c0_0, %c0_1] : memref<2x8x4xf32, #tpu.memory_space<vmem>>, vector<2x1x4xf32>
    %1 = vector.shape_cast %0 : vector<2x1x4xf32> to vector<2x4xf32>
    %c0_2 = arith.constant 0 : index
    %c1 = arith.constant 1 : index
    %c0_3 = arith.constant 0 : index
    %2 = vector.load %arg0[%c0_2, %c1, %c0_3] : memref<2x8x4xf32, #tpu.memory_space<vmem>>, vector<2x1x4xf32>
    %3 = vector.shape_cast %2 : vector<2x1x4xf32> to vector<2x4xf32>
    %c0_4 = arith.constant 0 : index
    %c2 = arith.constant 2 : index
    %c0_5 = arith.constant 0 : index
    %4 = vector.load %arg0[%c0_4, %c2, %c0_5] : memref<2x8x4xf32, #tpu.memory_space<vmem>>, vector<2x1x4xf32>
    %5 = vector.shape_cast %4 : vector<2x1x4xf32> to vector<2x4xf32>
    %c0_6 = arith.constant 0 : index
    %c3 = arith.constant 3 : index
    %c0_7 = arith.constant 0 : index
    %6 = vector.load %arg0[%c0_6, %c3, %c0_7] : memref<2x8x4xf32, #tpu.memory_space<vmem>>, vector<2x1x4xf32>
    %7 = vector.shape_cast %6 : vector<2x1x4xf32> to vector<2x4xf32>
    %c0_8 = arith.constant 0 : index
    %c4 = arith.constant 4 : index
    %c0_9 = arith.constant 0 : index
    %8 = vector.load %arg0[%c0_8, %c4, %c0_9] : memref<2x8x4xf32, #tpu.memory_space<vmem>>, vector<2x1x4xf32>
    %9 = vector.shape_cast %8 : vector<2x1x4xf32> to vector<2x4xf32>
    %c0_10 = arith.constant 0 : index
    %c5 = arith.constant 5 : index
    %c0_11 = arith.constant 0 : index
    %10 = vector.load %arg0[%c0_10, %c5, %c0_11] : memref<2x8x4xf32, #tpu.memory_space<vmem>>, vector<2x1x4xf32>
    %11 = vector.shape_cast %10 : vector<2x1x4xf32> to vector<2x4xf32>
    %c0_12 = arith.constant 0 : index
    %c6 = arith.constant 6 : index
    %c0_13 = arith.constant 0 : index
    %12 = vector.load %arg0[%c0_12, %c6, %c0_13] : memref<2x8x4xf32, #tpu.memory_space<vmem>>, vector<2x1x4xf32>
    %13 = vector.shape_cast %12 : vector<2x1x4xf32> to vector<2x4xf32>
    %c0_14 = arith.constant 0 : index
    %c7 = arith.constant 7 : index
    %c0_15 = arith.constant 0 : index
    %14 = vector.load %arg0[%c0_14, %c7, %c0_15] : memref<2x8x4xf32, #tpu.memory_space<vmem>>, vector<2x1x4xf32>
    %15 = vector.shape_cast %14 : vector<2x1x4xf32> to vector<2x4xf32>
    %16 = tpu.concatenate %1, %3, %5, %7, %9, %11, %13, %15 in 0 : vector<2x4xf32>, vector<2x4xf32>, vector<2x4xf32>, vector<2x4xf32>, vector<2x4xf32>, vector<2x4xf32>, vector<2x4xf32>, vector<2x4xf32> -> vector<16x4xf32>
    %c0_16 = arith.constant 0 : index
    %c0_17 = arith.constant 0 : index
    %17 = vector.load %arg1[%c0_16, %c0_17] : memref<4x128xf32, #tpu.memory_space<vmem>>, vector<4x128xf32>
    %c0_18 = arith.constant 0 : index
    %c0_19 = arith.constant 0 : index
    %18 = vector.load %arg2[%c0_18, %c0_19] : memref<32x128xf32, #tpu.memory_space<vmem>>, vector<32x128xf32>
    %c0_20 = arith.constant 0 : index
    %c0_21 = arith.constant 0 : index
    %19 = vector.load %arg3[%c0_20, %c0_21] : memref<1x128xf32, #tpu.memory_space<vmem>>, vector<1x128xf32>
    %cst = arith.constant dense<0.000000e+00> : vector<16x128xf32>
    %20 = tpu.matmul %16, %17, %cst {dimension_numbers = #tpu.dot_dimension_numbers<[1], [0], [0], [1], [0, 0, 1, 1], [], []>} : vector<16x4xf32>, vector<4x128xf32>, vector<16x128xf32> -> vector<16x128xf32>
    %21 = vector.broadcast %19 : vector<1x128xf32> to vector<16x128xf32>
    %22 = arith.addf %20, %21 : vector<16x128xf32>
    %cst_22 = arith.constant 0.000000e+00 : f32
    %23 = vector.broadcast %cst_22 : f32 to vector<2x32xf32>
    %cst_23 = arith.constant 0.000000e+00 : f32
    %24 = vector.broadcast %cst_23 : f32 to vector<2x32xf32>
    %25 = vector.extract_strided_slice %22 {offsets = [0, 0], sizes = [2, 128], strides = [1, 1]} : vector<16x128xf32> to vector<2x128xf32>
    %cst_24 = arith.constant dense<0.000000e+00> : vector<2x128xf32>
    %26 = tpu.matmul %23, %18, %cst_24 {dimension_numbers = #tpu.dot_dimension_numbers<[1], [0], [0], [1], [0, 0, 1, 1], [], []>} : vector<2x32xf32>, vector<32x128xf32>, vector<2x128xf32> -> vector<2x128xf32>
    %27 = arith.addf %25, %26 : vector<2x128xf32>
    %28 = arith.negf %27 : vector<2x128xf32>
    %29 = math.exp %28 : vector<2x128xf32>
    %cst_25 = arith.constant 1.000000e+00 : f32
    %30 = vector.broadcast %cst_25 : f32 to vector<2x128xf32>
    %31 = arith.addf %30, %29 : vector<2x128xf32>
    %32 = arith.divf %30, %31 : vector<2x128xf32>
    %33 = math.tanh %27 : vector<2x128xf32>
    %34 = vector.extract_strided_slice %32 {offsets = [0, 0], sizes = [2, 32], strides = [1, 1]} : vector<2x128xf32> to vector<2x32xf32>
    %35 = vector.extract_strided_slice %32 {offsets = [0, 32], sizes = [2, 32], strides = [1, 1]} : vector<2x128xf32> to vector<2x32xf32>
    %36 = vector.extract_strided_slice %33 {offsets = [0, 64], sizes = [2, 32], strides = [1, 1]} : vector<2x128xf32> to vector<2x32xf32>
    %37 = vector.extract_strided_slice %32 {offsets = [0, 96], sizes = [2, 32], strides = [1, 1]} : vector<2x128xf32> to vector<2x32xf32>
    %38 = arith.mulf %35, %24 : vector<2x32xf32>
    %39 = arith.mulf %34, %36 : vector<2x32xf32>
    %40 = arith.addf %38, %39 : vector<2x32xf32>
    %41 = math.tanh %40 : vector<2x32xf32>
    %42 = arith.mulf %37, %41 : vector<2x32xf32>
    %43 = vector.extract_strided_slice %22 {offsets = [2, 0], sizes = [2, 128], strides = [1, 1]} : vector<16x128xf32> to vector<2x128xf32>
    %cst_26 = arith.constant dense<0.000000e+00> : vector<2x128xf32>
    %44 = tpu.matmul %42, %18, %cst_26 {dimension_numbers = #tpu.dot_dimension_numbers<[1], [0], [0], [1], [0, 0, 1, 1], [], []>} : vector<2x32xf32>, vector<32x128xf32>, vector<2x128xf32> -> vector<2x128xf32>
    %45 = arith.addf %43, %44 : vector<2x128xf32>
    %46 = arith.negf %45 : vector<2x128xf32>
    %47 = math.exp %46 : vector<2x128xf32>
    %cst_27 = arith.constant 1.000000e+00 : f32
    %48 = vector.broadcast %cst_27 : f32 to vector<2x128xf32>
    %49 = arith.addf %48, %47 : vector<2x128xf32>
    %50 = arith.divf %48, %49 : vector<2x128xf32>
    %51 = math.tanh %45 : vector<2x128xf32>
    %52 = vector.extract_strided_slice %50 {offsets = [0, 0], sizes = [2, 32], strides = [1, 1]} : vector<2x128xf32> to vector<2x32xf32>
    %53 = vector.extract_strided_slice %50 {offsets = [0, 32], sizes = [2, 32], strides = [1, 1]} : vector<2x128xf32> to vector<2x32xf32>
    %54 = vector.extract_strided_slice %51 {offsets = [0, 64], sizes = [2, 32], strides = [1, 1]} : vector<2x128xf32> to vector<2x32xf32>
    %55 = vector.extract_strided_slice %50 {offsets = [0, 96], sizes = [2, 32], strides = [1, 1]} : vector<2x128xf32> to vector<2x32xf32>
    %56 = arith.mulf %53, %40 : vector<2x32xf32>
    %57 = arith.mulf %52, %54 : vector<2x32xf32>
    %58 = arith.addf %56, %57 : vector<2x32xf32>
    %59 = math.tanh %58 : vector<2x32xf32>
    %60 = arith.mulf %55, %59 : vector<2x32xf32>
    %61 = vector.extract_strided_slice %22 {offsets = [4, 0], sizes = [2, 128], strides = [1, 1]} : vector<16x128xf32> to vector<2x128xf32>
    %cst_28 = arith.constant dense<0.000000e+00> : vector<2x128xf32>
    %62 = tpu.matmul %60, %18, %cst_28 {dimension_numbers = #tpu.dot_dimension_numbers<[1], [0], [0], [1], [0, 0, 1, 1], [], []>} : vector<2x32xf32>, vector<32x128xf32>, vector<2x128xf32> -> vector<2x128xf32>
    %63 = arith.addf %61, %62 : vector<2x128xf32>
    %64 = arith.negf %63 : vector<2x128xf32>
    %65 = math.exp %64 : vector<2x128xf32>
    %cst_29 = arith.constant 1.000000e+00 : f32
    %66 = vector.broadcast %cst_29 : f32 to vector<2x128xf32>
    %67 = arith.addf %66, %65 : vector<2x128xf32>
    %68 = arith.divf %66, %67 : vector<2x128xf32>
    %69 = math.tanh %63 : vector<2x128xf32>
    %70 = vector.extract_strided_slice %68 {offsets = [0, 0], sizes = [2, 32], strides = [1, 1]} : vector<2x128xf32> to vector<2x32xf32>
    %71 = vector.extract_strided_slice %68 {offsets = [0, 32], sizes = [2, 32], strides = [1, 1]} : vector<2x128xf32> to vector<2x32xf32>
    %72 = vector.extract_strided_slice %69 {offsets = [0, 64], sizes = [2, 32], strides = [1, 1]} : vector<2x128xf32> to vector<2x32xf32>
    %73 = vector.extract_strided_slice %68 {offsets = [0, 96], sizes = [2, 32], strides = [1, 1]} : vector<2x128xf32> to vector<2x32xf32>
    %74 = arith.mulf %71, %58 : vector<2x32xf32>
    %75 = arith.mulf %70, %72 : vector<2x32xf32>
    %76 = arith.addf %74, %75 : vector<2x32xf32>
    %77 = math.tanh %76 : vector<2x32xf32>
    %78 = arith.mulf %73, %77 : vector<2x32xf32>
    %79 = vector.extract_strided_slice %22 {offsets = [6, 0], sizes = [2, 128], strides = [1, 1]} : vector<16x128xf32> to vector<2x128xf32>
    %cst_30 = arith.constant dense<0.000000e+00> : vector<2x128xf32>
    %80 = tpu.matmul %78, %18, %cst_30 {dimension_numbers = #tpu.dot_dimension_numbers<[1], [0], [0], [1], [0, 0, 1, 1], [], []>} : vector<2x32xf32>, vector<32x128xf32>, vector<2x128xf32> -> vector<2x128xf32>
    %81 = arith.addf %79, %80 : vector<2x128xf32>
    %82 = arith.negf %81 : vector<2x128xf32>
    %83 = math.exp %82 : vector<2x128xf32>
    %cst_31 = arith.constant 1.000000e+00 : f32
    %84 = vector.broadcast %cst_31 : f32 to vector<2x128xf32>
    %85 = arith.addf %84, %83 : vector<2x128xf32>
    %86 = arith.divf %84, %85 : vector<2x128xf32>
    %87 = math.tanh %81 : vector<2x128xf32>
    %88 = vector.extract_strided_slice %86 {offsets = [0, 0], sizes = [2, 32], strides = [1, 1]} : vector<2x128xf32> to vector<2x32xf32>
    %89 = vector.extract_strided_slice %86 {offsets = [0, 32], sizes = [2, 32], strides = [1, 1]} : vector<2x128xf32> to vector<2x32xf32>
    %90 = vector.extract_strided_slice %87 {offsets = [0, 64], sizes = [2, 32], strides = [1, 1]} : vector<2x128xf32> to vector<2x32xf32>
    %91 = vector.extract_strided_slice %86 {offsets = [0, 96], sizes = [2, 32], strides = [1, 1]} : vector<2x128xf32> to vector<2x32xf32>
    %92 = arith.mulf %89, %76 : vector<2x32xf32>
    %93 = arith.mulf %88, %90 : vector<2x32xf32>
    %94 = arith.addf %92, %93 : vector<2x32xf32>
    %95 = math.tanh %94 : vector<2x32xf32>
    %96 = arith.mulf %91, %95 : vector<2x32xf32>
    %97 = vector.extract_strided_slice %22 {offsets = [8, 0], sizes = [2, 128], strides = [1, 1]} : vector<16x128xf32> to vector<2x128xf32>
    %cst_32 = arith.constant dense<0.000000e+00> : vector<2x128xf32>
    %98 = tpu.matmul %96, %18, %cst_32 {dimension_numbers = #tpu.dot_dimension_numbers<[1], [0], [0], [1], [0, 0, 1, 1], [], []>} : vector<2x32xf32>, vector<32x128xf32>, vector<2x128xf32> -> vector<2x128xf32>
    %99 = arith.addf %97, %98 : vector<2x128xf32>
    %100 = arith.negf %99 : vector<2x128xf32>
    %101 = math.exp %100 : vector<2x128xf32>
    %cst_33 = arith.constant 1.000000e+00 : f32
    %102 = vector.broadcast %cst_33 : f32 to vector<2x128xf32>
    %103 = arith.addf %102, %101 : vector<2x128xf32>
    %104 = arith.divf %102, %103 : vector<2x128xf32>
    %105 = math.tanh %99 : vector<2x128xf32>
    %106 = vector.extract_strided_slice %104 {offsets = [0, 0], sizes = [2, 32], strides = [1, 1]} : vector<2x128xf32> to vector<2x32xf32>
    %107 = vector.extract_strided_slice %104 {offsets = [0, 32], sizes = [2, 32], strides = [1, 1]} : vector<2x128xf32> to vector<2x32xf32>
    %108 = vector.extract_strided_slice %105 {offsets = [0, 64], sizes = [2, 32], strides = [1, 1]} : vector<2x128xf32> to vector<2x32xf32>
    %109 = vector.extract_strided_slice %104 {offsets = [0, 96], sizes = [2, 32], strides = [1, 1]} : vector<2x128xf32> to vector<2x32xf32>
    %110 = arith.mulf %107, %94 : vector<2x32xf32>
    %111 = arith.mulf %106, %108 : vector<2x32xf32>
    %112 = arith.addf %110, %111 : vector<2x32xf32>
    %113 = math.tanh %112 : vector<2x32xf32>
    %114 = arith.mulf %109, %113 : vector<2x32xf32>
    %115 = vector.extract_strided_slice %22 {offsets = [10, 0], sizes = [2, 128], strides = [1, 1]} : vector<16x128xf32> to vector<2x128xf32>
    %cst_34 = arith.constant dense<0.000000e+00> : vector<2x128xf32>
    %116 = tpu.matmul %114, %18, %cst_34 {dimension_numbers = #tpu.dot_dimension_numbers<[1], [0], [0], [1], [0, 0, 1, 1], [], []>} : vector<2x32xf32>, vector<32x128xf32>, vector<2x128xf32> -> vector<2x128xf32>
    %117 = arith.addf %115, %116 : vector<2x128xf32>
    %118 = arith.negf %117 : vector<2x128xf32>
    %119 = math.exp %118 : vector<2x128xf32>
    %cst_35 = arith.constant 1.000000e+00 : f32
    %120 = vector.broadcast %cst_35 : f32 to vector<2x128xf32>
    %121 = arith.addf %120, %119 : vector<2x128xf32>
    %122 = arith.divf %120, %121 : vector<2x128xf32>
    %123 = math.tanh %117 : vector<2x128xf32>
    %124 = vector.extract_strided_slice %122 {offsets = [0, 0], sizes = [2, 32], strides = [1, 1]} : vector<2x128xf32> to vector<2x32xf32>
    %125 = vector.extract_strided_slice %122 {offsets = [0, 32], sizes = [2, 32], strides = [1, 1]} : vector<2x128xf32> to vector<2x32xf32>
    %126 = vector.extract_strided_slice %123 {offsets = [0, 64], sizes = [2, 32], strides = [1, 1]} : vector<2x128xf32> to vector<2x32xf32>
    %127 = vector.extract_strided_slice %122 {offsets = [0, 96], sizes = [2, 32], strides = [1, 1]} : vector<2x128xf32> to vector<2x32xf32>
    %128 = arith.mulf %125, %112 : vector<2x32xf32>
    %129 = arith.mulf %124, %126 : vector<2x32xf32>
    %130 = arith.addf %128, %129 : vector<2x32xf32>
    %131 = math.tanh %130 : vector<2x32xf32>
    %132 = arith.mulf %127, %131 : vector<2x32xf32>
    %133 = vector.extract_strided_slice %22 {offsets = [12, 0], sizes = [2, 128], strides = [1, 1]} : vector<16x128xf32> to vector<2x128xf32>
    %cst_36 = arith.constant dense<0.000000e+00> : vector<2x128xf32>
    %134 = tpu.matmul %132, %18, %cst_36 {dimension_numbers = #tpu.dot_dimension_numbers<[1], [0], [0], [1], [0, 0, 1, 1], [], []>} : vector<2x32xf32>, vector<32x128xf32>, vector<2x128xf32> -> vector<2x128xf32>
    %135 = arith.addf %133, %134 : vector<2x128xf32>
    %136 = arith.negf %135 : vector<2x128xf32>
    %137 = math.exp %136 : vector<2x128xf32>
    %cst_37 = arith.constant 1.000000e+00 : f32
    %138 = vector.broadcast %cst_37 : f32 to vector<2x128xf32>
    %139 = arith.addf %138, %137 : vector<2x128xf32>
    %140 = arith.divf %138, %139 : vector<2x128xf32>
    %141 = math.tanh %135 : vector<2x128xf32>
    %142 = vector.extract_strided_slice %140 {offsets = [0, 0], sizes = [2, 32], strides = [1, 1]} : vector<2x128xf32> to vector<2x32xf32>
    %143 = vector.extract_strided_slice %140 {offsets = [0, 32], sizes = [2, 32], strides = [1, 1]} : vector<2x128xf32> to vector<2x32xf32>
    %144 = vector.extract_strided_slice %141 {offsets = [0, 64], sizes = [2, 32], strides = [1, 1]} : vector<2x128xf32> to vector<2x32xf32>
    %145 = vector.extract_strided_slice %140 {offsets = [0, 96], sizes = [2, 32], strides = [1, 1]} : vector<2x128xf32> to vector<2x32xf32>
    %146 = arith.mulf %143, %130 : vector<2x32xf32>
    %147 = arith.mulf %142, %144 : vector<2x32xf32>
    %148 = arith.addf %146, %147 : vector<2x32xf32>
    %149 = math.tanh %148 : vector<2x32xf32>
    %150 = arith.mulf %145, %149 : vector<2x32xf32>
    %151 = vector.extract_strided_slice %22 {offsets = [14, 0], sizes = [2, 128], strides = [1, 1]} : vector<16x128xf32> to vector<2x128xf32>
    %cst_38 = arith.constant dense<0.000000e+00> : vector<2x128xf32>
    %152 = tpu.matmul %150, %18, %cst_38 {dimension_numbers = #tpu.dot_dimension_numbers<[1], [0], [0], [1], [0, 0, 1, 1], [], []>} : vector<2x32xf32>, vector<32x128xf32>, vector<2x128xf32> -> vector<2x128xf32>
    %153 = arith.addf %151, %152 : vector<2x128xf32>
    %154 = arith.negf %153 : vector<2x128xf32>
    %155 = math.exp %154 : vector<2x128xf32>
    %cst_39 = arith.constant 1.000000e+00 : f32
    %156 = vector.broadcast %cst_39 : f32 to vector<2x128xf32>
    %157 = arith.addf %156, %155 : vector<2x128xf32>
    %158 = arith.divf %156, %157 : vector<2x128xf32>
    %159 = math.tanh %153 : vector<2x128xf32>
    %160 = vector.extract_strided_slice %158 {offsets = [0, 0], sizes = [2, 32], strides = [1, 1]} : vector<2x128xf32> to vector<2x32xf32>
    %161 = vector.extract_strided_slice %158 {offsets = [0, 32], sizes = [2, 32], strides = [1, 1]} : vector<2x128xf32> to vector<2x32xf32>
    %162 = vector.extract_strided_slice %159 {offsets = [0, 64], sizes = [2, 32], strides = [1, 1]} : vector<2x128xf32> to vector<2x32xf32>
    %163 = vector.extract_strided_slice %158 {offsets = [0, 96], sizes = [2, 32], strides = [1, 1]} : vector<2x128xf32> to vector<2x32xf32>
    %164 = arith.mulf %161, %148 : vector<2x32xf32>
    %165 = arith.mulf %160, %162 : vector<2x32xf32>
    %166 = arith.addf %164, %165 : vector<2x32xf32>
    %167 = math.tanh %166 : vector<2x32xf32>
    %168 = arith.mulf %163, %167 : vector<2x32xf32>
    %169 = tpu.concatenate %42, %60, %78, %96, %114, %132, %150, %168 in 0 : vector<2x32xf32>, vector<2x32xf32>, vector<2x32xf32>, vector<2x32xf32>, vector<2x32xf32>, vector<2x32xf32>, vector<2x32xf32>, vector<2x32xf32> -> vector<16x32xf32>
    %c0_40 = arith.constant 0 : index
    %c0_41 = arith.constant 0 : index
    %170 = vector.load %arg4[%c0_40, %c0_41] : memref<32x128xf32, #tpu.memory_space<vmem>>, vector<32x128xf32>
    %c0_42 = arith.constant 0 : index
    %c0_43 = arith.constant 0 : index
    %171 = vector.load %arg5[%c0_42, %c0_43] : memref<32x128xf32, #tpu.memory_space<vmem>>, vector<32x128xf32>
    %c0_44 = arith.constant 0 : index
    %c0_45 = arith.constant 0 : index
    %172 = vector.load %arg6[%c0_44, %c0_45] : memref<1x128xf32, #tpu.memory_space<vmem>>, vector<1x128xf32>
    %cst_46 = arith.constant dense<0.000000e+00> : vector<16x128xf32>
    %173 = tpu.matmul %169, %170, %cst_46 {dimension_numbers = #tpu.dot_dimension_numbers<[1], [0], [0], [1], [0, 0, 1, 1], [], []>} : vector<16x32xf32>, vector<32x128xf32>, vector<16x128xf32> -> vector<16x128xf32>
    %174 = vector.broadcast %172 : vector<1x128xf32> to vector<16x128xf32>
    %175 = arith.addf %173, %174 : vector<16x128xf32>
    %cst_47 = arith.constant 0.000000e+00 : f32
    %176 = vector.broadcast %cst_47 : f32 to vector<2x32xf32>
    %cst_48 = arith.constant 0.000000e+00 : f32
    %177 = vector.broadcast %cst_48 : f32 to vector<2x32xf32>
    %178 = vector.extract_strided_slice %175 {offsets = [0, 0], sizes = [2, 128], strides = [1, 1]} : vector<16x128xf32> to vector<2x128xf32>
    %cst_49 = arith.constant dense<0.000000e+00> : vector<2x128xf32>
    %179 = tpu.matmul %176, %171, %cst_49 {dimension_numbers = #tpu.dot_dimension_numbers<[1], [0], [0], [1], [0, 0, 1, 1], [], []>} : vector<2x32xf32>, vector<32x128xf32>, vector<2x128xf32> -> vector<2x128xf32>
    %180 = arith.addf %178, %179 : vector<2x128xf32>
    %181 = arith.negf %180 : vector<2x128xf32>
    %182 = math.exp %181 : vector<2x128xf32>
    %cst_50 = arith.constant 1.000000e+00 : f32
    %183 = vector.broadcast %cst_50 : f32 to vector<2x128xf32>
    %184 = arith.addf %183, %182 : vector<2x128xf32>
    %185 = arith.divf %183, %184 : vector<2x128xf32>
    %186 = math.tanh %180 : vector<2x128xf32>
    %187 = vector.extract_strided_slice %185 {offsets = [0, 0], sizes = [2, 32], strides = [1, 1]} : vector<2x128xf32> to vector<2x32xf32>
    %188 = vector.extract_strided_slice %185 {offsets = [0, 32], sizes = [2, 32], strides = [1, 1]} : vector<2x128xf32> to vector<2x32xf32>
    %189 = vector.extract_strided_slice %186 {offsets = [0, 64], sizes = [2, 32], strides = [1, 1]} : vector<2x128xf32> to vector<2x32xf32>
    %190 = vector.extract_strided_slice %185 {offsets = [0, 96], sizes = [2, 32], strides = [1, 1]} : vector<2x128xf32> to vector<2x32xf32>
    %191 = arith.mulf %188, %177 : vector<2x32xf32>
    %192 = arith.mulf %187, %189 : vector<2x32xf32>
    %193 = arith.addf %191, %192 : vector<2x32xf32>
    %194 = math.tanh %193 : vector<2x32xf32>
    %195 = arith.mulf %190, %194 : vector<2x32xf32>
    %196 = vector.extract_strided_slice %175 {offsets = [2, 0], sizes = [2, 128], strides = [1, 1]} : vector<16x128xf32> to vector<2x128xf32>
    %cst_51 = arith.constant dense<0.000000e+00> : vector<2x128xf32>
    %197 = tpu.matmul %195, %171, %cst_51 {dimension_numbers = #tpu.dot_dimension_numbers<[1], [0], [0], [1], [0, 0, 1, 1], [], []>} : vector<2x32xf32>, vector<32x128xf32>, vector<2x128xf32> -> vector<2x128xf32>
    %198 = arith.addf %196, %197 : vector<2x128xf32>
    %199 = arith.negf %198 : vector<2x128xf32>
    %200 = math.exp %199 : vector<2x128xf32>
    %cst_52 = arith.constant 1.000000e+00 : f32
    %201 = vector.broadcast %cst_52 : f32 to vector<2x128xf32>
    %202 = arith.addf %201, %200 : vector<2x128xf32>
    %203 = arith.divf %201, %202 : vector<2x128xf32>
    %204 = math.tanh %198 : vector<2x128xf32>
    %205 = vector.extract_strided_slice %203 {offsets = [0, 0], sizes = [2, 32], strides = [1, 1]} : vector<2x128xf32> to vector<2x32xf32>
    %206 = vector.extract_strided_slice %203 {offsets = [0, 32], sizes = [2, 32], strides = [1, 1]} : vector<2x128xf32> to vector<2x32xf32>
    %207 = vector.extract_strided_slice %204 {offsets = [0, 64], sizes = [2, 32], strides = [1, 1]} : vector<2x128xf32> to vector<2x32xf32>
    %208 = vector.extract_strided_slice %203 {offsets = [0, 96], sizes = [2, 32], strides = [1, 1]} : vector<2x128xf32> to vector<2x32xf32>
    %209 = arith.mulf %206, %193 : vector<2x32xf32>
    %210 = arith.mulf %205, %207 : vector<2x32xf32>
    %211 = arith.addf %209, %210 : vector<2x32xf32>
    %212 = math.tanh %211 : vector<2x32xf32>
    %213 = arith.mulf %208, %212 : vector<2x32xf32>
    %214 = vector.extract_strided_slice %175 {offsets = [4, 0], sizes = [2, 128], strides = [1, 1]} : vector<16x128xf32> to vector<2x128xf32>
    %cst_53 = arith.constant dense<0.000000e+00> : vector<2x128xf32>
    %215 = tpu.matmul %213, %171, %cst_53 {dimension_numbers = #tpu.dot_dimension_numbers<[1], [0], [0], [1], [0, 0, 1, 1], [], []>} : vector<2x32xf32>, vector<32x128xf32>, vector<2x128xf32> -> vector<2x128xf32>
    %216 = arith.addf %214, %215 : vector<2x128xf32>
    %217 = arith.negf %216 : vector<2x128xf32>
    %218 = math.exp %217 : vector<2x128xf32>
    %cst_54 = arith.constant 1.000000e+00 : f32
    %219 = vector.broadcast %cst_54 : f32 to vector<2x128xf32>
    %220 = arith.addf %219, %218 : vector<2x128xf32>
    %221 = arith.divf %219, %220 : vector<2x128xf32>
    %222 = math.tanh %216 : vector<2x128xf32>
    %223 = vector.extract_strided_slice %221 {offsets = [0, 0], sizes = [2, 32], strides = [1, 1]} : vector<2x128xf32> to vector<2x32xf32>
    %224 = vector.extract_strided_slice %221 {offsets = [0, 32], sizes = [2, 32], strides = [1, 1]} : vector<2x128xf32> to vector<2x32xf32>
    %225 = vector.extract_strided_slice %222 {offsets = [0, 64], sizes = [2, 32], strides = [1, 1]} : vector<2x128xf32> to vector<2x32xf32>
    %226 = vector.extract_strided_slice %221 {offsets = [0, 96], sizes = [2, 32], strides = [1, 1]} : vector<2x128xf32> to vector<2x32xf32>
    %227 = arith.mulf %224, %211 : vector<2x32xf32>
    %228 = arith.mulf %223, %225 : vector<2x32xf32>
    %229 = arith.addf %227, %228 : vector<2x32xf32>
    %230 = math.tanh %229 : vector<2x32xf32>
    %231 = arith.mulf %226, %230 : vector<2x32xf32>
    %232 = vector.extract_strided_slice %175 {offsets = [6, 0], sizes = [2, 128], strides = [1, 1]} : vector<16x128xf32> to vector<2x128xf32>
    %cst_55 = arith.constant dense<0.000000e+00> : vector<2x128xf32>
    %233 = tpu.matmul %231, %171, %cst_55 {dimension_numbers = #tpu.dot_dimension_numbers<[1], [0], [0], [1], [0, 0, 1, 1], [], []>} : vector<2x32xf32>, vector<32x128xf32>, vector<2x128xf32> -> vector<2x128xf32>
    %234 = arith.addf %232, %233 : vector<2x128xf32>
    %235 = arith.negf %234 : vector<2x128xf32>
    %236 = math.exp %235 : vector<2x128xf32>
    %cst_56 = arith.constant 1.000000e+00 : f32
    %237 = vector.broadcast %cst_56 : f32 to vector<2x128xf32>
    %238 = arith.addf %237, %236 : vector<2x128xf32>
    %239 = arith.divf %237, %238 : vector<2x128xf32>
    %240 = math.tanh %234 : vector<2x128xf32>
    %241 = vector.extract_strided_slice %239 {offsets = [0, 0], sizes = [2, 32], strides = [1, 1]} : vector<2x128xf32> to vector<2x32xf32>
    %242 = vector.extract_strided_slice %239 {offsets = [0, 32], sizes = [2, 32], strides = [1, 1]} : vector<2x128xf32> to vector<2x32xf32>
    %243 = vector.extract_strided_slice %240 {offsets = [0, 64], sizes = [2, 32], strides = [1, 1]} : vector<2x128xf32> to vector<2x32xf32>
    %244 = vector.extract_strided_slice %239 {offsets = [0, 96], sizes = [2, 32], strides = [1, 1]} : vector<2x128xf32> to vector<2x32xf32>
    %245 = arith.mulf %242, %229 : vector<2x32xf32>
    %246 = arith.mulf %241, %243 : vector<2x32xf32>
    %247 = arith.addf %245, %246 : vector<2x32xf32>
    %248 = math.tanh %247 : vector<2x32xf32>
    %249 = arith.mulf %244, %248 : vector<2x32xf32>
    %250 = vector.extract_strided_slice %175 {offsets = [8, 0], sizes = [2, 128], strides = [1, 1]} : vector<16x128xf32> to vector<2x128xf32>
    %cst_57 = arith.constant dense<0.000000e+00> : vector<2x128xf32>
    %251 = tpu.matmul %249, %171, %cst_57 {dimension_numbers = #tpu.dot_dimension_numbers<[1], [0], [0], [1], [0, 0, 1, 1], [], []>} : vector<2x32xf32>, vector<32x128xf32>, vector<2x128xf32> -> vector<2x128xf32>
    %252 = arith.addf %250, %251 : vector<2x128xf32>
    %253 = arith.negf %252 : vector<2x128xf32>
    %254 = math.exp %253 : vector<2x128xf32>
    %cst_58 = arith.constant 1.000000e+00 : f32
    %255 = vector.broadcast %cst_58 : f32 to vector<2x128xf32>
    %256 = arith.addf %255, %254 : vector<2x128xf32>
    %257 = arith.divf %255, %256 : vector<2x128xf32>
    %258 = math.tanh %252 : vector<2x128xf32>
    %259 = vector.extract_strided_slice %257 {offsets = [0, 0], sizes = [2, 32], strides = [1, 1]} : vector<2x128xf32> to vector<2x32xf32>
    %260 = vector.extract_strided_slice %257 {offsets = [0, 32], sizes = [2, 32], strides = [1, 1]} : vector<2x128xf32> to vector<2x32xf32>
    %261 = vector.extract_strided_slice %258 {offsets = [0, 64], sizes = [2, 32], strides = [1, 1]} : vector<2x128xf32> to vector<2x32xf32>
    %262 = vector.extract_strided_slice %257 {offsets = [0, 96], sizes = [2, 32], strides = [1, 1]} : vector<2x128xf32> to vector<2x32xf32>
    %263 = arith.mulf %260, %247 : vector<2x32xf32>
    %264 = arith.mulf %259, %261 : vector<2x32xf32>
    %265 = arith.addf %263, %264 : vector<2x32xf32>
    %266 = math.tanh %265 : vector<2x32xf32>
    %267 = arith.mulf %262, %266 : vector<2x32xf32>
    %268 = vector.extract_strided_slice %175 {offsets = [10, 0], sizes = [2, 128], strides = [1, 1]} : vector<16x128xf32> to vector<2x128xf32>
    %cst_59 = arith.constant dense<0.000000e+00> : vector<2x128xf32>
    %269 = tpu.matmul %267, %171, %cst_59 {dimension_numbers = #tpu.dot_dimension_numbers<[1], [0], [0], [1], [0, 0, 1, 1], [], []>} : vector<2x32xf32>, vector<32x128xf32>, vector<2x128xf32> -> vector<2x128xf32>
    %270 = arith.addf %268, %269 : vector<2x128xf32>
    %271 = arith.negf %270 : vector<2x128xf32>
    %272 = math.exp %271 : vector<2x128xf32>
    %cst_60 = arith.constant 1.000000e+00 : f32
    %273 = vector.broadcast %cst_60 : f32 to vector<2x128xf32>
    %274 = arith.addf %273, %272 : vector<2x128xf32>
    %275 = arith.divf %273, %274 : vector<2x128xf32>
    %276 = math.tanh %270 : vector<2x128xf32>
    %277 = vector.extract_strided_slice %275 {offsets = [0, 0], sizes = [2, 32], strides = [1, 1]} : vector<2x128xf32> to vector<2x32xf32>
    %278 = vector.extract_strided_slice %275 {offsets = [0, 32], sizes = [2, 32], strides = [1, 1]} : vector<2x128xf32> to vector<2x32xf32>
    %279 = vector.extract_strided_slice %276 {offsets = [0, 64], sizes = [2, 32], strides = [1, 1]} : vector<2x128xf32> to vector<2x32xf32>
    %280 = vector.extract_strided_slice %275 {offsets = [0, 96], sizes = [2, 32], strides = [1, 1]} : vector<2x128xf32> to vector<2x32xf32>
    %281 = arith.mulf %278, %265 : vector<2x32xf32>
    %282 = arith.mulf %277, %279 : vector<2x32xf32>
    %283 = arith.addf %281, %282 : vector<2x32xf32>
    %284 = math.tanh %283 : vector<2x32xf32>
    %285 = arith.mulf %280, %284 : vector<2x32xf32>
    %286 = vector.extract_strided_slice %175 {offsets = [12, 0], sizes = [2, 128], strides = [1, 1]} : vector<16x128xf32> to vector<2x128xf32>
    %cst_61 = arith.constant dense<0.000000e+00> : vector<2x128xf32>
    %287 = tpu.matmul %285, %171, %cst_61 {dimension_numbers = #tpu.dot_dimension_numbers<[1], [0], [0], [1], [0, 0, 1, 1], [], []>} : vector<2x32xf32>, vector<32x128xf32>, vector<2x128xf32> -> vector<2x128xf32>
    %288 = arith.addf %286, %287 : vector<2x128xf32>
    %289 = arith.negf %288 : vector<2x128xf32>
    %290 = math.exp %289 : vector<2x128xf32>
    %cst_62 = arith.constant 1.000000e+00 : f32
    %291 = vector.broadcast %cst_62 : f32 to vector<2x128xf32>
    %292 = arith.addf %291, %290 : vector<2x128xf32>
    %293 = arith.divf %291, %292 : vector<2x128xf32>
    %294 = math.tanh %288 : vector<2x128xf32>
    %295 = vector.extract_strided_slice %293 {offsets = [0, 0], sizes = [2, 32], strides = [1, 1]} : vector<2x128xf32> to vector<2x32xf32>
    %296 = vector.extract_strided_slice %293 {offsets = [0, 32], sizes = [2, 32], strides = [1, 1]} : vector<2x128xf32> to vector<2x32xf32>
    %297 = vector.extract_strided_slice %294 {offsets = [0, 64], sizes = [2, 32], strides = [1, 1]} : vector<2x128xf32> to vector<2x32xf32>
    %298 = vector.extract_strided_slice %293 {offsets = [0, 96], sizes = [2, 32], strides = [1, 1]} : vector<2x128xf32> to vector<2x32xf32>
    %299 = arith.mulf %296, %283 : vector<2x32xf32>
    %300 = arith.mulf %295, %297 : vector<2x32xf32>
    %301 = arith.addf %299, %300 : vector<2x32xf32>
    %302 = math.tanh %301 : vector<2x32xf32>
    %303 = arith.mulf %298, %302 : vector<2x32xf32>
    %304 = vector.extract_strided_slice %175 {offsets = [14, 0], sizes = [2, 128], strides = [1, 1]} : vector<16x128xf32> to vector<2x128xf32>
    %cst_63 = arith.constant dense<0.000000e+00> : vector<2x128xf32>
    %305 = tpu.matmul %303, %171, %cst_63 {dimension_numbers = #tpu.dot_dimension_numbers<[1], [0], [0], [1], [0, 0, 1, 1], [], []>} : vector<2x32xf32>, vector<32x128xf32>, vector<2x128xf32> -> vector<2x128xf32>
    %306 = arith.addf %304, %305 : vector<2x128xf32>
    %307 = arith.negf %306 : vector<2x128xf32>
    %308 = math.exp %307 : vector<2x128xf32>
    %cst_64 = arith.constant 1.000000e+00 : f32
    %309 = vector.broadcast %cst_64 : f32 to vector<2x128xf32>
    %310 = arith.addf %309, %308 : vector<2x128xf32>
    %311 = arith.divf %309, %310 : vector<2x128xf32>
    %312 = math.tanh %306 : vector<2x128xf32>
    %313 = vector.extract_strided_slice %311 {offsets = [0, 0], sizes = [2, 32], strides = [1, 1]} : vector<2x128xf32> to vector<2x32xf32>
    %314 = vector.extract_strided_slice %311 {offsets = [0, 32], sizes = [2, 32], strides = [1, 1]} : vector<2x128xf32> to vector<2x32xf32>
    %315 = vector.extract_strided_slice %312 {offsets = [0, 64], sizes = [2, 32], strides = [1, 1]} : vector<2x128xf32> to vector<2x32xf32>
    %316 = vector.extract_strided_slice %311 {offsets = [0, 96], sizes = [2, 32], strides = [1, 1]} : vector<2x128xf32> to vector<2x32xf32>
    %317 = arith.mulf %314, %301 : vector<2x32xf32>
    %318 = arith.mulf %313, %315 : vector<2x32xf32>
    %319 = arith.addf %317, %318 : vector<2x32xf32>
    %320 = math.tanh %319 : vector<2x32xf32>
    %321 = arith.mulf %316, %320 : vector<2x32xf32>
    %c0_65 = arith.constant 0 : index
    %c0_66 = arith.constant 0 : index
    %322 = vector.load %arg7[%c0_65, %c0_66] : memref<32x1xf32, #tpu.memory_space<vmem>>, vector<32x1xf32>
    %cst_67 = arith.constant dense<0.000000e+00> : vector<2x1xf32>
    %323 = tpu.matmul %321, %322, %cst_67 {dimension_numbers = #tpu.dot_dimension_numbers<[1], [0], [0], [1], [0, 0, 1, 1], [], []>} : vector<2x32xf32>, vector<32x1xf32>, vector<2x1xf32> -> vector<2x1xf32>
    %c0_68 = arith.constant 0 : index
    %c0_69 = arith.constant 0 : index
    %324 = vector.load %arg8[%c0_68, %c0_69] : memref<1x1xf32, #tpu.memory_space<vmem>>, vector<1x1xf32>
    %325 = vector.broadcast %324 : vector<1x1xf32> to vector<2x1xf32>
    %326 = arith.addf %323, %325 : vector<2x1xf32>
    %c0_70 = arith.constant 0 : index
    %c0_71 = arith.constant 0 : index
    %327 = vector.load %arg9[%c0_70, %c0_71] : memref<2x1xf32, #tpu.memory_space<vmem>>, vector<2x1xf32>
    tpu.vector_store %arg9[%c0_70, %c0_71], %326 {strides = array<i32>} : memref<2x1xf32, #tpu.memory_space<vmem>>, vector<2x1xf32>,
    return
  }
}

</mosaic_0001>

<llo_original>
// kernel: tpu_custom_call.1
$region0: #{tpu_custom_call.1}
  #allocation0 [shape = 'u32[]', space=smem, size = 0x4, offset = 0x4, fixed_abs, tag = 'smem constant byte address 0x4 - core index']
  #allocation1 [shape = 'u32[72,128]{1,0:T(1,128)}', space=vmem, size = 0x9000, scoped, tag = 'internal scratch']
  #allocation2 [shape = 'f32[1,1]{1,0:T(1,128)S(1)}', space=vmem, size = 0x200, scoped, tag = 'scoped memory for tpu_custom_call.1']
  %s0 = inlined_call_operand.vmem [shape: f32[2,8,4], index: 0, kind: input, shape index: {}]
  %s1 = inlined_call_operand.vmem [shape: f32[4,128], index: 1, kind: input, shape index: {}]
  %s2 = inlined_call_operand.vmem [shape: f32[32,128], index: 2, kind: input, shape index: {}]
  %s3 = inlined_call_operand.vmem [shape: f32[1,128], index: 3, kind: input, shape index: {}]
  %s4 = inlined_call_operand.hbm [shape: f32[32,128], index: 4, kind: input, shape index: {}]
  %s5 = inlined_call_operand.hbm [shape: f32[32,128], index: 5, kind: input, shape index: {}]
  %s6 = inlined_call_operand.vmem [shape: f32[1,128], index: 6, kind: input, shape index: {}]
  %s7 = inlined_call_operand.vmem [shape: f32[32,1], index: 7, kind: input, shape index: {}]
  %s8 = inlined_call_operand.<no memory space> [shape: f32[1,1], index: 8, kind: input, shape index: {}]
  %s9 = inlined_call_operand.vmem [shape: f32[2,1], index: 9, kind: output, shape index: {}]
  %s10 = sld [smem:[#allocation0]]
  $region54: #{tpu_custom_call.1} parent=0
    _
  %s12 = ssub.s32 1, %s10
  %s13 = scalar_select 0, %s12, %s10
  %v14 = vstv %s8
  %15 = vst [vmem:[#allocation2] sm:$0x1] %v14
  $region1: #{tpu_custom_call.1} parent=0
    #allocation3 [shape = 'u8[16384]{0}', space=vmem, size = 0x4000, scoped, tag = 'input window, operand 4, single buffered']
    #allocation4 [shape = 's32[1]{0}', space=sflag, size = 0x4, scoped, tag = 'scoped memory for tpu_custom_call.1']
    #allocation5 [shape = 'u8[16384]{0}', space=vmem, size = 0x4000, scoped, tag = 'input window, operand 5, single buffered']
    #allocation6 [shape = 's32[1]{0}', space=sflag, size = 0x4, scoped, tag = 'scoped memory for tpu_custom_call.1']
    %16 = vsyncpa [#allocation4], 0
    %17 = vsyncpa [#allocation6], 0
    // Predicated region
    $region2: #{tpu_custom_call.1} parent=1 // pred_check
      _
    $region3: #{tpu_custom_call.1} parent=1 // pred_check_branch
      %19 = sbr.rel (0) target = $region5
    $region4: #{tpu_custom_call.1} parent=1 // pred_region
      _
    $region5: #{tpu_custom_call.1} parent=1 // pred_fallthru
      _
    // Predicated region
    $region6: #{tpu_custom_call.1} parent=1 // pred_check
      _
    $region7: #{tpu_custom_call.1} parent=1 // pred_check_branch
      %21 = sbr.rel (0) target = $region9
    $region8: #{tpu_custom_call.1} parent=1 // pred_region
      _
    $region9: #{tpu_custom_call.1} parent=1 // pred_fallthru
      _
    // Predicated region
    $region10: #{tpu_custom_call.1} parent=1 // pred_check
      _
    $region11: #{tpu_custom_call.1} parent=1 // pred_check_branch
      %23 = sbr.rel (0) target = $region13
    $region12: #{tpu_custom_call.1} parent=1 // pred_region
      _
    $region13: #{tpu_custom_call.1} parent=1 // pred_fallthru
      _
    // Predicated region
    $region14: #{tpu_custom_call.1} parent=1 // pred_check
      _
    $region15: #{tpu_custom_call.1} parent=1 // pred_check_branch
      %25 = sbr.rel (0) target = $region17
    $region16: #{tpu_custom_call.1} parent=1 // pred_region
      _
    $region17: #{tpu_custom_call.1} parent=1 // pred_fallthru
      _
    // Predicated region
    $region18: #{tpu_custom_call.1} parent=1 // pred_check
      _
    $region19: #{tpu_custom_call.1} parent=1 // pred_check_branch
      %27 = sbr.rel (0) target = $region21
    $region20: #{tpu_custom_call.1} parent=1 // pred_region
      %29 = vsyncadd [#allocation4], 0
      %s30 = sshll.u32 %s4, 4
      %s31 = int_to_ptr.hbm [resolvable:$true] %s30
      %s32 = sshll.u32 [#allocation3], 4
      %s33 = int_to_ptr.vmem [resolvable:$true] %s32
      %38 = dma.hbm_to_vmem [thread:$0]  %s31, 512, %s33, [#allocation4], 128, 128, 8
    $region21: #{tpu_custom_call.1} parent=1 // pred_fallthru
      _
    // Predicated region
    $region22: #{tpu_custom_call.1} parent=1 // pred_check
      _
    $region23: #{tpu_custom_call.1} parent=1 // pred_check_branch
      %40 = sbr.rel (0) target = $region25
    $region24: #{tpu_custom_call.1} parent=1 // pred_region
      %42 = vsyncadd [#allocation6], 0
      %s43 = sshll.u32 %s5, 4
      %s44 = int_to_ptr.hbm [resolvable:$true] %s43
      %s45 = sshll.u32 [#allocation5], 4
      %s46 = int_to_ptr.vmem [resolvable:$true] %s45
      %51 = dma.hbm_to_vmem [thread:$0]  %s44, 512, %s46, [#allocation6], 128, 128, 8
    $region25: #{tpu_custom_call.1} parent=1 // pred_fallthru
      _
    // Predicated region
    $region26: #{tpu_custom_call.1} parent=1 // pred_check
      _
    $region27: #{tpu_custom_call.1} parent=1 // pred_check_branch
      %53 = sbr.rel (0) target = $region29
    $region28: #{tpu_custom_call.1} parent=1 // pred_region
      _
    $region29: #{tpu_custom_call.1} parent=1 // pred_fallthru
      _
    // Predicated region
    $region30: #{tpu_custom_call.1} parent=1 // pred_check
      _
    $region31: #{tpu_custom_call.1} parent=1 // pred_check_branch
      %55 = sbr.rel (0) target = $region33
    $region32: #{tpu_custom_call.1} parent=1 // pred_region
      _
    $region33: #{tpu_custom_call.1} parent=1 // pred_fallthru
      _
    // Predicated region
    $region34: #{tpu_custom_call.1} parent=1 // pred_check
      _
    $region35: #{tpu_custom_call.1} parent=1 // pred_check_branch
      %57 = sbr.rel (0) target = $region37
    $region36: #{tpu_custom_call.1} parent=1 // pred_region
      _
    $region37: #{tpu_custom_call.1} parent=1 // pred_fallthru
      _
    // Predicated region
    $region38: #{tpu_custom_call.1} parent=1 // pred_check
      _
    $region39: #{tpu_custom_call.1} parent=1 // pred_check_branch
      %59 = sbr.rel (0) target = $region41
    $region40: #{tpu_custom_call.1} parent=1 // pred_region
      %61 = dma.done [#allocation4], 512
    $region41: #{tpu_custom_call.1} parent=1 // pred_fallthru
      _
    // Predicated region
    $region42: #{tpu_custom_call.1} parent=1 // pred_check
      _
    $region43: #{tpu_custom_call.1} parent=1 // pred_check_branch
      %63 = sbr.rel (0) target = $region45
    $region44: #{tpu_custom_call.1} parent=1 // pred_region
      %65 = dma.done [#allocation6], 512
    $region45: #{tpu_custom_call.1} parent=1 // pred_fallthru
      _
    %v66 = vld [vmem:[%s0] sm:$0x1]
    %v67 = vld [vmem:[%s0 + $0x8] sm:$0x1]
    %v68 = vld [vmem:[%s0 + $0x1] sm:$0x1]
    %v69 = vld [vmem:[%s0 + $0x9] sm:$0x1]
    %v70 = vld [vmem:[%s0 + $0x2] sm:$0x1]
    %v71 = vld [vmem:[%s0 + $0xa] sm:$0x1]
    %v72 = vld [vmem:[%s0 + $0x3] sm:$0x1]
    %v73 = vld [vmem:[%s0 + $0xb] sm:$0x1]
    %v74 = vld [vmem:[%s0 + $0x4] sm:$0x1]
    %v75 = vld [vmem:[%s0 + $0xc] sm:$0x1]
    %v76 = vld [vmem:[%s0 + $0x5] sm:$0x1]
    %v77 = vld [vmem:[%s0 + $0xd] sm:$0x1]
    %v78 = vld [vmem:[%s0 + $0x6] sm:$0x1]
    %v79 = vld [vmem:[%s0 + $0xe] sm:$0x1]
    %v80 = vld [vmem:[%s0 + $0x7] sm:$0x1]
    %v81 = vld [vmem:[%s0 + $0xf] sm:$0x1]
    %v84 = vrot.slane %v67, 7
    %vm85 = vcmask 1041409
    %v86 = vsel %vm85, %v84, %v66
    %v90 = vrot.slane %v68, 6
    %v91 = vrot.slane %v69, 5
    %vm92 = vcmask 1043459
    %v93 = vsel %vm92, %v91, %v90
    %v97 = vrot.slane %v70, 4
    %v98 = vrot.slane %v71, 3
    %vm99 = vcmask 1045509
    %v100 = vsel %vm99, %v98, %v97
    %v104 = vrot.slane %v72, 2
    %v105 = vrot.slane %v73, 1
    %vm106 = vcmask 1047559
    %v107 = vsel %vm106, %v105, %v104
    %v111 = vrot.slane %v75, 7
    %v112 = vsel %vm85, %v111, %v74
    %v116 = vrot.slane %v76, 6
    %v117 = vrot.slane %v77, 5
    %v118 = vsel %vm92, %v117, %v116
    %v122 = vrot.slane %v78, 4
    %v123 = vrot.slane %v79, 3
    %v124 = vsel %vm99, %v123, %v122
    %v128 = vrot.slane %v80, 2
    %v129 = vrot.slane %v81, 1
    %v130 = vsel %vm106, %v129, %v128
    %vm132 = vcmask 1041408
    %v133 = vsel %vm132, %v86, %v93
    %vm134 = vcmask 1043456
    %v135 = vsel %vm134, %v133, %v100
    %vm136 = vcmask 1045504
    %v137 = vsel %vm136, %v135, %v107
    %v138 = vsel %vm132, %v112, %v118
    %v139 = vsel %vm134, %v138, %v124
    %v140 = vsel %vm136, %v139, %v130
    %v141 = vld [vmem:[%s1] sm:$0xf]
    %v142 = vld [vmem:[%s2] sm:$0xff]
    %v143 = vld [vmem:[%s2 + $0x8] sm:$0xff]
    %v144 = vld [vmem:[%s2 + $0x10] sm:$0xff]
    %v145 = vld [vmem:[%s2 + $0x18] sm:$0xff]
    %v146 = vld [vmem:[%s3] sm:$0x1]
    %v148 = vperm.slane %v146, 0
    %vm150 = vcmask 31744
    %v152 = vsel %vm150, %v137, 0
    %v155 = vsel %vm150, %v140, 0
    %v158 = vsel %vm134, %v141, 0
    %160 = vmatpush.msra.mxu0 0.0
    %161 = vmatpush.msra.mxu0 0.0
    %162 = vmatpush.msra.mxu0 0.0
    %163 = vmatpush.msra.mxu0 0.0
    %164 = vmatpush.msra.mxu0 0.0
    %165 = vmatpush.msra.mxu0 0.0
    %166 = vmatpush.msra.mxu0 0.0
    %167 = vmatpush.msra.mxu0 0.0
    %168 = vmatpush.msra.mxu0 0.0
    %169 = vmatpush.msra.mxu0 0.0
    %170 = vmatpush.msra.mxu0 0.0
    %171 = vmatpush.msra.mxu0 0.0
    %172 = vmatpush.msra.mxu0 0.0
    %173 = vmatpush.msra.mxu0 0.0
    %174 = vmatpush.msra.mxu0 0.0
    %175 = vmatpush.msra.mxu0 %v158
    %176 = vmatmul.f32.gmra.mxu0 %v152
    %v177 = vpop.f32.mrf.mxu0
    %v178 = vadd.f32 %v148, %v177
    %179 = vmatmul.f32.gmra.mxu0 %v155
    %v180 = vpop.f32.mrf.mxu0
    %v181 = vadd.f32 %v148, %v180
    %182 = vdwg.mxu0
    %vm183 = vcmask 261120
    %v185 = vsel %vm183, 0.0, 0
    %187 = vmatpush.msra.mxu0 0.0
    %188 = vmatpush.msra.mxu0 0.0
    %189 = vmatpush.msra.mxu0 0.0
    %190 = vmatpush.msra.mxu0 0.0
    %191 = vmatpush.msra.mxu0 0.0
    %192 = vmatpush.msra.mxu0 0.0
    %193 = vmatpush.msra.mxu0 0.0
    %194 = vmatpush.msra.mxu0 0.0
    %195 = vmatpush.msra.mxu0 0.0
    %196 = vmatpush.msra.mxu0 0.0
    %197 = vmatpush.msra.mxu0 0.0
    %198 = vmatpush.msra.mxu0 0.0
    %199 = vmatpush.msra.mxu0 %v145
    %200 = vmatpush.msra.mxu0 %v144
    %201 = vmatpush.msra.mxu0 %v143
    %202 = vmatpush.msra.mxu0 %v142
    %203 = vmatmul.f32.gmra.mxu0 %v185
    %v204 = vpop.f32.mrf.mxu0
    %v205 = vadd.f32 0.0, %v204
    %206 = vdwg.mxu0
    %v207 = vadd.f32 %v178, %v205
    %v208 = vxor.u32 %v207, 2147483648
    %v209 = vmul.f32 %v208, 1.442695
    %v210 = vpow.pop %v209
    %v211 = vadd.f32 %v210, 1.0
    %v212 = vrcp.pop %v211
    %v213 = vmul.f32 %v211, %v212
    %v214 = vsub.f32 1.0, %v213
    %v215 = vmul.f32 %v212, %v214
    %v216 = vadd.f32 %v212, %v215
    %vm217 = vweird.f32 %v211
    %vm218 = vweird.f32 %v212
    %vm219 = vmor %vm217, %vm218
    %v220 = vsel %vm219, %v212, %v216
    %v221 = vand.u32 2147483647, %v211
    %vm222 = vcmp.eq.f32.partialorder %v221, 8.507059e+37
    %v223 = vand.u32 %v211, 2147483648
    %v224 = vor.u32 1.1754944e-38, %v223
    %v225 = vsel %vm222, %v224, %v220
    %v226 = vmul.f32 1.0, %v225
    %v227 = vtanh.pop %v207
    %v228 = vmul.f32 %v226, 0.0
    %230 = vrot.lane.b32.xlu0 %v227, 64
    %v231 = vpop.permute.xlu0 %230
    %v233 = vmul.f32 %v226, %v231
    %235 = vrot.lane.b32.xlu0 %v233, 32
    %v236 = vpop.permute.xlu0 %235
    %v238 = vadd.f32 %v228, %v236
    %v239 = vtanh.pop %v238
    %241 = vrot.lane.b32.xlu0 %v239, 64
    %v242 = vpop.permute.xlu0 %241
    %v244 = vmul.f32 %v226, %v242
    %246 = vrot.lane.b32.xlu0 %v244, 32
    %v247 = vpop.permute.xlu0 %246
    %v248 = vsel %vm183, %v247, 0
    %250 = vmatpush.msra.mxu0 0.0
    %251 = vmatpush.msra.mxu0 0.0
    %252 = vmatpush.msra.mxu0 0.0
    %253 = vmatpush.msra.mxu0 0.0
    %254 = vmatpush.msra.mxu0 0.0
    %255 = vmatpush.msra.mxu0 0.0
    %256 = vmatpush.msra.mxu0 0.0
    %257 = vmatpush.msra.mxu0 0.0
    %258 = vmatpush.msra.mxu0 0.0
    %259 = vmatpush.msra.mxu0 0.0
    %260 = vmatpush.msra.mxu0 0.0
    %261 = vmatpush.msra.mxu0 0.0
    %262 = vmatpush.msra.mxu0 %v145
    %263 = vmatpush.msra.mxu0 %v144
    %264 = vmatpush.msra.mxu0 %v143
    %265 = vmatpush.msra.mxu0 %v142
    %266 = vmatmul.f32.gmra.mxu0 %v248
    %v267 = vpop.f32.mrf.mxu0
    %v268 = vadd.f32 0.0, %v267
    %269 = vdwg.mxu0
    %v271 = vrot.slane %v268, 6
    %v273 = vadd.f32 %v178, %v271
    %v274 = vxor.u32 %v273, 2147483648
    %v275 = vmul.f32 %v274, 1.442695
    %v276 = vpow.pop %v275
    %v277 = vadd.f32 %v276, 1.0
    %v278 = vrcp.pop %v277
    %v279 = vmul.f32 %v277, %v278
    %v280 = vsub.f32 1.0, %v279
    %v281 = vmul.f32 %v278, %v280
    %v282 = vadd.f32 %v278, %v281
    %vm283 = vweird.f32 %v277
    %vm284 = vweird.f32 %v278
    %vm285 = vmor %vm283, %vm284
    %v286 = vsel %vm285, %v278, %v282
    %v287 = vand.u32 2147483647, %v277
    %vm288 = vcmp.eq.f32.partialorder %v287, 8.507059e+37
    %v289 = vand.u32 %v277, 2147483648
    %v290 = vor.u32 1.1754944e-38, %v289
    %v291 = vsel %vm288, %v290, %v286
    %v292 = vmul.f32 1.0, %v291
    %v293 = vtanh.pop %v273
    %v295 = vrot.slane %v238, 6
    %v297 = vmul.f32 %v292, %v295
    %299 = vrot.lane.b32.xlu0 %v293, 64
    %v300 = vpop.permute.xlu0 %299
    %v302 = vmul.f32 %v292, %v300
    %304 = vrot.lane.b32.xlu0 %v302, 32
    %v305 = vpop.permute.xlu0 %304
    %v307 = vadd.f32 %v297, %v305
    %v308 = vtanh.pop %v307
    %310 = vrot.lane.b32.xlu0 %v308, 64
    %v311 = vpop.permute.xlu0 %310
    %v313 = vmul.f32 %v292, %v311
    %v315 = vrot.slane %v313, 2
    %316 = vrot.lane.b32.xlu0 %v315, 32
    %v317 = vpop.permute.xlu0 %316
    %v318 = vsel %vm183, %v317, 0
    %320 = vmatpush.msra.mxu0 0.0
    %321 = vmatpush.msra.mxu0 0.0
    %322 = vmatpush.msra.mxu0 0.0
    %323 = vmatpush.msra.mxu0 0.0
    %324 = vmatpush.msra.mxu0 0.0
    %325 = vmatpush.msra.mxu0 0.0
    %326 = vmatpush.msra.mxu0 0.0
    %327 = vmatpush.msra.mxu0 0.0
    %328 = vmatpush.msra.mxu0 0.0
    %329 = vmatpush.msra.mxu0 0.0
    %330 = vmatpush.msra.mxu0 0.0
    %331 = vmatpush.msra.mxu0 0.0
    %332 = vmatpush.msra.mxu0 %v145
    %333 = vmatpush.msra.mxu0 %v144
    %334 = vmatpush.msra.mxu0 %v143
    %335 = vmatpush.msra.mxu0 %v142
    %336 = vmatmul.f32.gmra.mxu0 %v318
    %v337 = vpop.f32.mrf.mxu0
    %v338 = vadd.f32 0.0, %v337
    %339 = vdwg.mxu0
    %v341 = vrot.slane %v338, 4
    %v343 = vadd.f32 %v178, %v341
    %v344 = vxor.u32 %v343, 2147483648
    %v345 = vmul.f32 %v344, 1.442695
    %v346 = vpow.pop %v345
    %v347 = vadd.f32 %v346, 1.0
    %v348 = vrcp.pop %v347
    %v349 = vmul.f32 %v347, %v348
    %v350 = vsub.f32 1.0, %v349
    %v351 = vmul.f32 %v348, %v350
    %v352 = vadd.f32 %v348, %v351
    %vm353 = vweird.f32 %v347
    %vm354 = vweird.f32 %v348
    %vm355 = vmor %vm353, %vm354
    %v356 = vsel %vm355, %v348, %v352
    %v357 = vand.u32 2147483647, %v347
    %vm358 = vcmp.eq.f32.partialorder %v357, 8.507059e+37
    %v359 = vand.u32 %v347, 2147483648
    %v360 = vor.u32 1.1754944e-38, %v359
    %v361 = vsel %vm358, %v360, %v356
    %v362 = vmul.f32 1.0, %v361
    %v363 = vtanh.pop %v343
    %v365 = vrot.slane %v307, 6
    %v367 = vmul.f32 %v362, %v365
    %369 = vrot.lane.b32.xlu0 %v363, 64
    %v370 = vpop.permute.xlu0 %369
    %v372 = vmul.f32 %v362, %v370
    %374 = vrot.lane.b32.xlu0 %v372, 32
    %v375 = vpop.permute.xlu0 %374
    %v377 = vadd.f32 %v367, %v375
    %v378 = vtanh.pop %v377
    %380 = vrot.lane.b32.xlu0 %v378, 64
    %v381 = vpop.permute.xlu0 %380
    %v383 = vmul.f32 %v362, %v381
    %v385 = vrot.slane %v383, 4
    %386 = vrot.lane.b32.xlu0 %v385, 32
    %v387 = vpop.permute.xlu0 %386
    %v388 = vsel %vm183, %v387, 0
    %390 = vmatpush.msra.mxu0 0.0
    %391 = vmatpush.msra.mxu0 0.0
    %392 = vmatpush.msra.mxu0 0.0
    %393 = vmatpush.msra.mxu0 0.0
    %394 = vmatpush.msra.mxu0 0.0
    %395 = vmatpush.msra.mxu0 0.0
    %396 = vmatpush.msra.mxu0 0.0
    %397 = vmatpush.msra.mxu0 0.0
    %398 = vmatpush.msra.mxu0 0.0
    %399 = vmatpush.msra.mxu0 0.0
    %400 = vmatpush.msra.mxu0 0.0
    %401 = vmatpush.msra.mxu0 0.0
    %402 = vmatpush.msra.mxu0 %v145
    %403 = vmatpush.msra.mxu0 %v144
    %404 = vmatpush.msra.mxu0 %v143
    %405 = vmatpush.msra.mxu0 %v142
    %406 = vmatmul.f32.gmra.mxu0 %v388
    %v407 = vpop.f32.mrf.mxu0
    %v408 = vadd.f32 0.0, %v407
    %409 = vdwg.mxu0
    %v411 = vrot.slane %v408, 2
    %v413 = vadd.f32 %v178, %v411
    %v414 = vxor.u32 %v413, 2147483648
    %v415 = vmul.f32 %v414, 1.442695
    %v416 = vpow.pop %v415
    %v417 = vadd.f32 %v416, 1.0
    %v418 = vrcp.pop %v417
    %v419 = vmul.f32 %v417, %v418
    %v420 = vsub.f32 1.0, %v419
    %v421 = vmul.f32 %v418, %v420
    %v422 = vadd.f32 %v418, %v421
    %vm423 = vweird.f32 %v417
    %vm424 = vweird.f32 %v418
    %vm425 = vmor %vm423, %vm424
    %v426 = vsel %vm425, %v418, %v422
    %v427 = vand.u32 2147483647, %v417
    %vm428 = vcmp.eq.f32.partialorder %v427, 8.507059e+37
    %v429 = vand.u32 %v417, 2147483648
    %v430 = vor.u32 1.1754944e-38, %v429
    %v431 = vsel %vm428, %v430, %v426
    %v432 = vmul.f32 1.0, %v431
    %v433 = vtanh.pop %v413
    %v435 = vrot.slane %v377, 6
    %v437 = vmul.f32 %v432, %v435
    %439 = vrot.lane.b32.xlu0 %v433, 64
    %v440 = vpop.permute.xlu0 %439
    %v442 = vmul.f32 %v432, %v440
    %444 = vrot.lane.b32.xlu0 %v442, 32
    %v445 = vpop.permute.xlu0 %444
    %v447 = vadd.f32 %v437, %v445
    %v448 = vtanh.pop %v447
    %450 = vrot.lane.b32.xlu0 %v448, 64
    %v451 = vpop.permute.xlu0 %450
    %v453 = vmul.f32 %v432, %v451
    %v455 = vrot.slane %v453, 6
    %456 = vrot.lane.b32.xlu0 %v455, 32
    %v457 = vpop.permute.xlu0 %456
    %v458 = vsel %vm183, %v457, 0
    %460 = vmatpush.msra.mxu0 0.0
    %461 = vmatpush.msra.mxu0 0.0
    %462 = vmatpush.msra.mxu0 0.0
    %463 = vmatpush.msra.mxu0 0.0
    %464 = vmatpush.msra.mxu0 0.0
    %465 = vmatpush.msra.mxu0 0.0
    %466 = vmatpush.msra.mxu0 0.0
    %467 = vmatpush.msra.mxu0 0.0
    %468 = vmatpush.msra.mxu0 0.0
    %469 = vmatpush.msra.mxu0 0.0
    %470 = vmatpush.msra.mxu0 0.0
    %471 = vmatpush.msra.mxu0 0.0
    %472 = vmatpush.msra.mxu0 %v145
    %473 = vmatpush.msra.mxu0 %v144
    %474 = vmatpush.msra.mxu0 %v143
    %475 = vmatpush.msra.mxu0 %v142
    %476 = vmatmul.f32.gmra.mxu0 %v458
    %v477 = vpop.f32.mrf.mxu0
    %v478 = vadd.f32 0.0, %v477
    %479 = vdwg.mxu0
    %v480 = vadd.f32 %v181, %v478
    %v481 = vxor.u32 %v480, 2147483648
    %v482 = vmul.f32 %v481, 1.442695
    %v483 = vpow.pop %v482
    %v484 = vadd.f32 %v483, 1.0
    %v485 = vrcp.pop %v484
    %v486 = vmul.f32 %v484, %v485
    %v487 = vsub.f32 1.0, %v486
    %v488 = vmul.f32 %v485, %v487
    %v489 = vadd.f32 %v485, %v488
    %vm490 = vweird.f32 %v484
    %vm491 = vweird.f32 %v485
    %vm492 = vmor %vm490, %vm491
    %v493 = vsel %vm492, %v485, %v489
    %v494 = vand.u32 2147483647, %v484
    %vm495 = vcmp.eq.f32.partialorder %v494, 8.507059e+37
    %v496 = vand.u32 %v484, 2147483648
    %v497 = vor.u32 1.1754944e-38, %v496
    %v498 = vsel %vm495, %v497, %v493
    %v499 = vmul.f32 1.0, %v498
    %v500 = vtanh.pop %v480
    %v502 = vrot.slane %v447, 6
    %v504 = vmul.f32 %v499, %v502
    %506 = vrot.lane.b32.xlu0 %v500, 64
    %v507 = vpop.permute.xlu0 %506
    %v509 = vmul.f32 %v499, %v507
    %511 = vrot.lane.b32.xlu0 %v509, 32
    %v512 = vpop.permute.xlu0 %511
    %v514 = vadd.f32 %v504, %v512
    %v515 = vtanh.pop %v514
    %517 = vrot.lane.b32.xlu0 %v515, 64
    %v518 = vpop.permute.xlu0 %517
    %v520 = vmul.f32 %v499, %v518
    %522 = vrot.lane.b32.xlu0 %v520, 32
    %v523 = vpop.permute.xlu0 %522
    %v524 = vsel %vm183, %v523, 0
    %526 = vmatpush.msra.mxu0 0.0
    %527 = vmatpush.msra.mxu0 0.0
    %528 = vmatpush.msra.mxu0 0.0
    %529 = vmatpush.msra.mxu0 0.0
    %530 = vmatpush.msra.mxu0 0.0
    %531 = vmatpush.msra.mxu0 0.0
    %532 = vmatpush.msra.mxu0 0.0
    %533 = vmatpush.msra.mxu0 0.0
    %534 = vmatpush.msra.mxu0 0.0
    %535 = vmatpush.msra.mxu0 0.0
    %536 = vmatpush.msra.mxu0 0.0
    %537 = vmatpush.msra.mxu0 0.0
    %538 = vmatpush.msra.mxu0 %v145
    %539 = vmatpush.msra.mxu0 %v144
    %540 = vmatpush.msra.mxu0 %v143
    %541 = vmatpush.msra.mxu0 %v142
    %542 = vmatmul.f32.gmra.mxu0 %v524
    %v543 = vpop.f32.mrf.mxu0
    %v544 = vadd.f32 0.0, %v543
    %545 = vdwg.mxu0
    %v547 = vrot.slane %v544, 6
    %v549 = vadd.f32 %v181, %v547
    %v550 = vxor.u32 %v549, 2147483648
    %v551 = vmul.f32 %v550, 1.442695
    %v552 = vpow.pop %v551
    %v553 = vadd.f32 %v552, 1.0
    %v554 = vrcp.pop %v553
    %v555 = vmul.f32 %v553, %v554
    %v556 = vsub.f32 1.0, %v555
    %v557 = vmul.f32 %v554, %v556
    %v558 = vadd.f32 %v554, %v557
    %vm559 = vweird.f32 %v553
    %vm560 = vweird.f32 %v554
    %vm561 = vmor %vm559, %vm560
    %v562 = vsel %vm561, %v554, %v558
    %v563 = vand.u32 2147483647, %v553
    %vm564 = vcmp.eq.f32.partialorder %v563, 8.507059e+37
    %v565 = vand.u32 %v553, 2147483648
    %v566 = vor.u32 1.1754944e-38, %v565
    %v567 = vsel %vm564, %v566, %v562
    %v568 = vmul.f32 1.0, %v567
    %v569 = vtanh.pop %v549
    %v571 = vrot.slane %v514, 6
    %v573 = vmul.f32 %v568, %v571
    %575 = vrot.lane.b32.xlu0 %v569, 64
    %v576 = vpop.permute.xlu0 %575
    %v578 = vmul.f32 %v568, %v576
    %580 = vrot.lane.b32.xlu0 %v578, 32
    %v581 = vpop.permute.xlu0 %580
    %v583 = vadd.f32 %v573, %v581
    %v584 = vtanh.pop %v583
    %586 = vrot.lane.b32.xlu0 %v584, 64
    %v587 = vpop.permute.xlu0 %586
    %v589 = vmul.f32 %v568, %v587
    %v591 = vrot.slane %v589, 2
    %592 = vrot.lane.b32.xlu0 %v591, 32
    %v593 = vpop.permute.xlu0 %592
    %v594 = vsel %vm183, %v593, 0
    %596 = vmatpush.msra.mxu0 0.0
    %597 = vmatpush.msra.mxu0 0.0
    %598 = vmatpush.msra.mxu0 0.0
    %599 = vmatpush.msra.mxu0 0.0
    %600 = vmatpush.msra.mxu0 0.0
    %601 = vmatpush.msra.mxu0 0.0
    %602 = vmatpush.msra.mxu0 0.0
    %603 = vmatpush.msra.mxu0 0.0
    %604 = vmatpush.msra.mxu0 0.0
    %605 = vmatpush.msra.mxu0 0.0
    %606 = vmatpush.msra.mxu0 0.0
    %607 = vmatpush.msra.mxu0 0.0
    %608 = vmatpush.msra.mxu0 %v145
    %609 = vmatpush.msra.mxu0 %v144
    %610 = vmatpush.msra.mxu0 %v143
    %611 = vmatpush.msra.mxu0 %v142
    %612 = vmatmul.f32.gmra.mxu0 %v594
    %v613 = vpop.f32.mrf.mxu0
    %v614 = vadd.f32 0.0, %v613
    %615 = vdwg.mxu0
    %v617 = vrot.slane %v614, 4
    %v619 = vadd.f32 %v181, %v617
    %v620 = vxor.u32 %v619, 2147483648
    %v621 = vmul.f32 %v620, 1.442695
    %v622 = vpow.pop %v621
    %v623 = vadd.f32 %v622, 1.0
    %v624 = vrcp.pop %v623
    %v625 = vmul.f32 %v623, %v624
    %v626 = vsub.f32 1.0, %v625
    %v627 = vmul.f32 %v624, %v626
    %v628 = vadd.f32 %v624, %v627
    %vm629 = vweird.f32 %v623
    %vm630 = vweird.f32 %v624
    %vm631 = vmor %vm629, %vm630
    %v632 = vsel %vm631, %v624, %v628
    %v633 = vand.u32 2147483647, %v623
    %vm634 = vcmp.eq.f32.partialorder %v633, 8.507059e+37
    %v635 = vand.u32 %v623, 2147483648
    %v636 = vor.u32 1.1754944e-38, %v635
    %v637 = vsel %vm634, %v636, %v632
    %v638 = vmul.f32 1.0, %v637
    %v639 = vtanh.pop %v619
    %v641 = vrot.slane %v583, 6
    %v643 = vmul.f32 %v638, %v641
    %645 = vrot.lane.b32.xlu0 %v639, 64
    %v646 = vpop.permute.xlu0 %645
    %v648 = vmul.f32 %v638, %v646
    %650 = vrot.lane.b32.xlu0 %v648, 32
    %v651 = vpop.permute.xlu0 %650
    %v653 = vadd.f32 %v643, %v651
    %v654 = vtanh.pop %v653
    %656 = vrot.lane.b32.xlu0 %v654, 64
    %v657 = vpop.permute.xlu0 %656
    %v659 = vmul.f32 %v638, %v657
    %v661 = vrot.slane %v659, 4
    %662 = vrot.lane.b32.xlu0 %v661, 32
    %v663 = vpop.permute.xlu0 %662
    %v664 = vsel %vm183, %v663, 0
    %666 = vmatpush.msra.mxu0 0.0
    %667 = vmatpush.msra.mxu0 0.0
    %668 = vmatpush.msra.mxu0 0.0
    %669 = vmatpush.msra.mxu0 0.0
    %670 = vmatpush.msra.mxu0 0.0
    %671 = vmatpush.msra.mxu0 0.0
    %672 = vmatpush.msra.mxu0 0.0
    %673 = vmatpush.msra.mxu0 0.0
    %674 = vmatpush.msra.mxu0 0.0
    %675 = vmatpush.msra.mxu0 0.0
    %676 = vmatpush.msra.mxu0 0.0
    %677 = vmatpush.msra.mxu0 0.0
    %678 = vmatpush.msra.mxu0 %v145
    %679 = vmatpush.msra.mxu0 %v144
    %680 = vmatpush.msra.mxu0 %v143
    %681 = vmatpush.msra.mxu0 %v142
    %682 = vmatmul.f32.gmra.mxu0 %v664
    %v683 = vpop.f32.mrf.mxu0
    %v684 = vadd.f32 0.0, %v683
    %685 = vdwg.mxu0
    %v687 = vrot.slane %v684, 2
    %v689 = vadd.f32 %v181, %v687
    %v690 = vxor.u32 %v689, 2147483648
    %v691 = vmul.f32 %v690, 1.442695
    %v692 = vpow.pop %v691
    %v693 = vadd.f32 %v692, 1.0
    %v694 = vrcp.pop %v693
    %v695 = vmul.f32 %v693, %v694
    %v696 = vsub.f32 1.0, %v695
    %v697 = vmul.f32 %v694, %v696
    %v698 = vadd.f32 %v694, %v697
    %vm699 = vweird.f32 %v693
    %vm700 = vweird.f32 %v694
    %vm701 = vmor %vm699, %vm700
    %v702 = vsel %vm701, %v694, %v698
    %v703 = vand.u32 2147483647, %v693
    %vm704 = vcmp.eq.f32.partialorder %v703, 8.507059e+37
    %v705 = vand.u32 %v693, 2147483648
    %v706 = vor.u32 1.1754944e-38, %v705
    %v707 = vsel %vm704, %v706, %v702
    %v708 = vmul.f32 1.0, %v707
    %v709 = vtanh.pop %v689
    %v711 = vrot.slane %v653, 6
    %v713 = vmul.f32 %v708, %v711
    %715 = vrot.lane.b32.xlu0 %v709, 64
    %v716 = vpop.permute.xlu0 %715
    %v718 = vmul.f32 %v708, %v716
    %720 = vrot.lane.b32.xlu0 %v718, 32
    %v721 = vpop.permute.xlu0 %720
    %v723 = vadd.f32 %v713, %v721
    %v724 = vtanh.pop %v723
    %726 = vrot.lane.b32.xlu0 %v724, 64
    %v727 = vpop.permute.xlu0 %726
    %v729 = vmul.f32 %v708, %v727
    %v730 = vsel %vm132, %v244, %v313
    %v731 = vsel %vm134, %v730, %v383
    %v732 = vsel %vm136, %v731, %v453
    %v733 = vsel %vm132, %v520, %v589
    %v734 = vsel %vm134, %v733, %v659
    %v735 = vsel %vm136, %v734, %v729
    %v736 = vld [vmem:[#allocation3] sm:$0xff]
    %v737 = vld [vmem:[#allocation3 + $0x8] sm:$0xff]
    %v738 = vld [vmem:[#allocation3 + $0x10] sm:$0xff]
    %v739 = vld [vmem:[#allocation3 + $0x18] sm:$0xff]
    %v740 = vld [vmem:[#allocation5] sm:$0xff]
    %v741 = vld [vmem:[#allocation5 + $0x8] sm:$0xff]
    %v742 = vld [vmem:[#allocation5 + $0x10] sm:$0xff]
    %v743 = vld [vmem:[#allocation5 + $0x18] sm:$0xff]
    %v744 = vld [vmem:[%s6] sm:$0x1]
    %v746 = vperm.slane %v744, 0
    %750 = vrot.lane.b32.xlu0 %v732, 32
    %v751 = vpop.permute.xlu0 %750
    %752 = vrot.lane.b32.xlu0 %v735, 32
    %v753 = vpop.permute.xlu0 %752
    %v754 = vsel %vm183, %v751, 0
    %v756 = vsel %vm183, %v753, 0
    %758 = vmatpush.msra.mxu0 0.0
    %759 = vmatpush.msra.mxu0 0.0
    %760 = vmatpush.msra.mxu0 0.0
    %761 = vmatpush.msra.mxu0 0.0
    %762 = vmatpush.msra.mxu0 0.0
    %763 = vmatpush.msra.mxu0 0.0
    %764 = vmatpush.msra.mxu0 0.0
    %765 = vmatpush.msra.mxu0 0.0
    %766 = vmatpush.msra.mxu0 0.0
    %767 = vmatpush.msra.mxu0 0.0
    %768 = vmatpush.msra.mxu0 0.0
    %769 = vmatpush.msra.mxu0 0.0
    %770 = vmatpush.msra.mxu0 %v739
    %771 = vmatpush.msra.mxu0 %v738
    %772 = vmatpush.msra.mxu0 %v737
    %773 = vmatpush.msra.mxu0 %v736
    %774 = vmatmul.f32.gmra.mxu0 %v754
    %v775 = vpop.f32.mrf.mxu0
    %v776 = vadd.f32 %v746, %v775
    %777 = vmatmul.f32.gmra.mxu0 %v756
    %v778 = vpop.f32.mrf.mxu0
    %v779 = vadd.f32 %v746, %v778
    %780 = vdwg.mxu0
    %781 = vmatpush.msra.mxu0 0.0
    %782 = vmatpush.msra.mxu0 0.0
    %783 = vmatpush.msra.mxu0 0.0
    %784 = vmatpush.msra.mxu0 0.0
    %785 = vmatpush.msra.mxu0 0.0
    %786 = vmatpush.msra.mxu0 0.0
    %787 = vmatpush.msra.mxu0 0.0
    %788 = vmatpush.msra.mxu0 0.0
    %789 = vmatpush.msra.mxu0 0.0
    %790 = vmatpush.msra.mxu0 0.0
    %791 = vmatpush.msra.mxu0 0.0
    %792 = vmatpush.msra.mxu0 0.0
    %793 = vmatpush.msra.mxu0 %v743
    %794 = vmatpush.msra.mxu0 %v742
    %795 = vmatpush.msra.mxu0 %v741
    %796 = vmatpush.msra.mxu0 %v740
    %797 = vmatmul.f32.gmra.mxu0 %v185
    %v798 = vpop.f32.mrf.mxu0
    %v799 = vadd.f32 0.0, %v798
    %800 = vdwg.mxu0
    %v801 = vadd.f32 %v776, %v799
    %v802 = vxor.u32 %v801, 2147483648
    %v803 = vmul.f32 %v802, 1.442695
    %v804 = vpow.pop %v803
    %v805 = vadd.f32 %v804, 1.0
    %v806 = vrcp.pop %v805
    %v807 = vmul.f32 %v805, %v806
    %v808 = vsub.f32 1.0, %v807
    %v809 = vmul.f32 %v806, %v808
    %v810 = vadd.f32 %v806, %v809
    %vm811 = vweird.f32 %v805
    %vm812 = vweird.f32 %v806
    %vm813 = vmor %vm811, %vm812
    %v814 = vsel %vm813, %v806, %v810
    %v815 = vand.u32 2147483647, %v805
    %vm816 = vcmp.eq.f32.partialorder %v815, 8.507059e+37
    %v817 = vand.u32 %v805, 2147483648
    %v818 = vor.u32 1.1754944e-38, %v817
    %v819 = vsel %vm816, %v818, %v814
    %v820 = vmul.f32 1.0, %v819
    %v821 = vtanh.pop %v801
    %v822 = vmul.f32 %v820, 0.0
    %824 = vrot.lane.b32.xlu0 %v821, 64
    %v825 = vpop.permute.xlu0 %824
    %v827 = vmul.f32 %v820, %v825
    %829 = vrot.lane.b32.xlu0 %v827, 32
    %v830 = vpop.permute.xlu0 %829
    %v832 = vadd.f32 %v822, %v830
    %v833 = vtanh.pop %v832
    %835 = vrot.lane.b32.xlu0 %v833, 64
    %v836 = vpop.permute.xlu0 %835
    %v838 = vmul.f32 %v820, %v836
    %840 = vrot.lane.b32.xlu0 %v838, 32
    %v841 = vpop.permute.xlu0 %840
    %v842 = vsel %vm183, %v841, 0
    %844 = vmatpush.msra.mxu0 0.0
    %845 = vmatpush.msra.mxu0 0.0
    %846 = vmatpush.msra.mxu0 0.0
    %847 = vmatpush.msra.mxu0 0.0
    %848 = vmatpush.msra.mxu0 0.0
    %849 = vmatpush.msra.mxu0 0.0
    %850 = vmatpush.msra.mxu0 0.0
    %851 = vmatpush.msra.mxu0 0.0
    %852 = vmatpush.msra.mxu0 0.0
    %853 = vmatpush.msra.mxu0 0.0
    %854 = vmatpush.msra.mxu0 0.0
    %855 = vmatpush.msra.mxu0 0.0
    %856 = vmatpush.msra.mxu0 %v743
    %857 = vmatpush.msra.mxu0 %v742
    %858 = vmatpush.msra.mxu0 %v741
    %859 = vmatpush.msra.mxu0 %v740
    %860 = vmatmul.f32.gmra.mxu0 %v842
    %v861 = vpop.f32.mrf.mxu0
    %v862 = vadd.f32 0.0, %v861
    %863 = vdwg.mxu0
    %v865 = vrot.slane %v862, 6
    %v867 = vadd.f32 %v776, %v865
    %v868 = vxor.u32 %v867, 2147483648
    %v869 = vmul.f32 %v868, 1.442695
    %v870 = vpow.pop %v869
    %v871 = vadd.f32 %v870, 1.0
    %v872 = vrcp.pop %v871
    %v873 = vmul.f32 %v871, %v872
    %v874 = vsub.f32 1.0, %v873
    %v875 = vmul.f32 %v872, %v874
    %v876 = vadd.f32 %v872, %v875
    %vm877 = vweird.f32 %v871
    %vm878 = vweird.f32 %v872
    %vm879 = vmor %vm877, %vm878
    %v880 = vsel %vm879, %v872, %v876
    %v881 = vand.u32 2147483647, %v871
    %vm882 = vcmp.eq.f32.partialorder %v881, 8.507059e+37
    %v883 = vand.u32 %v871, 2147483648
    %v884 = vor.u32 1.1754944e-38, %v883
    %v885 = vsel %vm882, %v884, %v880
    %v886 = vmul.f32 1.0, %v885
    %v887 = vtanh.pop %v867
    %v889 = vrot.slane %v832, 6
    %v891 = vmul.f32 %v886, %v889
    %893 = vrot.lane.b32.xlu0 %v887, 64
    %v894 = vpop.permute.xlu0 %893
    %v896 = vmul.f32 %v886, %v894
    %898 = vrot.lane.b32.xlu0 %v896, 32
    %v899 = vpop.permute.xlu0 %898
    %v901 = vadd.f32 %v891, %v899
    %v902 = vtanh.pop %v901
    %904 = vrot.lane.b32.xlu0 %v902, 64
    %v905 = vpop.permute.xlu0 %904
    %v907 = vmul.f32 %v886, %v905
    %v909 = vrot.slane %v907, 2
    %910 = vrot.lane.b32.xlu0 %v909, 32
    %v911 = vpop.permute.xlu0 %910
    %v912 = vsel %vm183, %v911, 0
    %914 = vmatpush.msra.mxu0 0.0
    %915 = vmatpush.msra.mxu0 0.0
    %916 = vmatpush.msra.mxu0 0.0
    %917 = vmatpush.msra.mxu0 0.0
    %918 = vmatpush.msra.mxu0 0.0
    %919 = vmatpush.msra.mxu0 0.0
    %920 = vmatpush.msra.mxu0 0.0
    %921 = vmatpush.msra.mxu0 0.0
    %922 = vmatpush.msra.mxu0 0.0
    %923 = vmatpush.msra.mxu0 0.0
    %924 = vmatpush.msra.mxu0 0.0
    %925 = vmatpush.msra.mxu0 0.0
    %926 = vmatpush.msra.mxu0 %v743
    %927 = vmatpush.msra.mxu0 %v742
    %928 = vmatpush.msra.mxu0 %v741
    %929 = vmatpush.msra.mxu0 %v740
    %930 = vmatmul.f32.gmra.mxu0 %v912
    %v931 = vpop.f32.mrf.mxu0
    %v932 = vadd.f32 0.0, %v931
    %933 = vdwg.mxu0
    %v935 = vrot.slane %v932, 4
    %v937 = vadd.f32 %v776, %v935
    %v938 = vxor.u32 %v937, 2147483648
    %v939 = vmul.f32 %v938, 1.442695
    %v940 = vpow.pop %v939
    %v941 = vadd.f32 %v940, 1.0
    %v942 = vrcp.pop %v941
    %v943 = vmul.f32 %v941, %v942
    %v944 = vsub.f32 1.0, %v943
    %v945 = vmul.f32 %v942, %v944
    %v946 = vadd.f32 %v942, %v945
    %vm947 = vweird.f32 %v941
    %vm948 = vweird.f32 %v942
    %vm949 = vmor %vm947, %vm948
    %v950 = vsel %vm949, %v942, %v946
    %v951 = vand.u32 2147483647, %v941
    %vm952 = vcmp.eq.f32.partialorder %v951, 8.507059e+37
    %v953 = vand.u32 %v941, 2147483648
    %v954 = vor.u32 1.1754944e-38, %v953
    %v955 = vsel %vm952, %v954, %v950
    %v956 = vmul.f32 1.0, %v955
    %v957 = vtanh.pop %v937
    %v959 = vrot.slane %v901, 6
    %v961 = vmul.f32 %v956, %v959
    %963 = vrot.lane.b32.xlu0 %v957, 64
    %v964 = vpop.permute.xlu0 %963
    %v966 = vmul.f32 %v956, %v964
    %968 = vrot.lane.b32.xlu0 %v966, 32
    %v969 = vpop.permute.xlu0 %968
    %v971 = vadd.f32 %v961, %v969
    %v972 = vtanh.pop %v971
    %974 = vrot.lane.b32.xlu0 %v972, 64
    %v975 = vpop.permute.xlu0 %974
    %v977 = vmul.f32 %v956, %v975
    %v979 = vrot.slane %v977, 4
    %980 = vrot.lane.b32.xlu0 %v979, 32
    %v981 = vpop.permute.xlu0 %980
    %v982 = vsel %vm183, %v981, 0
    %984 = vmatpush.msra.mxu0 0.0
    %985 = vmatpush.msra.mxu0 0.0
    %986 = vmatpush.msra.mxu0 0.0
    %987 = vmatpush.msra.mxu0 0.0
    %988 = vmatpush.msra.mxu0 0.0
    %989 = vmatpush.msra.mxu0 0.0
    %990 = vmatpush.msra.mxu0 0.0
    %991 = vmatpush.msra.mxu0 0.0
    %992 = vmatpush.msra.mxu0 0.0
    %993 = vmatpush.msra.mxu0 0.0
    %994 = vmatpush.msra.mxu0 0.0
    %995 = vmatpush.msra.mxu0 0.0
    %996 = vmatpush.msra.mxu0 %v743
    %997 = vmatpush.msra.mxu0 %v742
    %998 = vmatpush.msra.mxu0 %v741
    %999 = vmatpush.msra.mxu0 %v740
    %1000 = vmatmul.f32.gmra.mxu0 %v982
    %v1001 = vpop.f32.mrf.mxu0
    %v1002 = vadd.f32 0.0, %v1001
    %1003 = vdwg.mxu0
    %v1005 = vrot.slane %v1002, 2
    %v1007 = vadd.f32 %v776, %v1005
    %v1008 = vxor.u32 %v1007, 2147483648
    %v1009 = vmul.f32 %v1008, 1.442695
    %v1010 = vpow.pop %v1009
    %v1011 = vadd.f32 %v1010, 1.0
    %v1012 = vrcp.pop %v1011
    %v1013 = vmul.f32 %v1011, %v1012
    %v1014 = vsub.f32 1.0, %v1013
    %v1015 = vmul.f32 %v1012, %v1014
    %v1016 = vadd.f32 %v1012, %v1015
    %vm1017 = vweird.f32 %v1011
    %vm1018 = vweird.f32 %v1012
    %vm1019 = vmor %vm1017, %vm1018
    %v1020 = vsel %vm1019, %v1012, %v1016
    %v1021 = vand.u32 2147483647, %v1011
    %vm1022 = vcmp.eq.f32.partialorder %v1021, 8.507059e+37
    %v1023 = vand.u32 %v1011, 2147483648
    %v1024 = vor.u32 1.1754944e-38, %v1023
    %v1025 = vsel %vm1022, %v1024, %v1020
    %v1026 = vmul.f32 1.0, %v1025
    %v1027 = vtanh.pop %v1007
    %v1029 = vrot.slane %v971, 6
    %v1031 = vmul.f32 %v1026, %v1029
    %1033 = vrot.lane.b32.xlu0 %v1027, 64
    %v1034 = vpop.permute.xlu0 %1033
    %v1036 = vmul.f32 %v1026, %v1034
    %1038 = vrot.lane.b32.xlu0 %v1036, 32
    %v1039 = vpop.permute.xlu0 %1038
    %v1041 = vadd.f32 %v1031, %v1039
    %v1042 = vtanh.pop %v1041
    %1044 = vrot.lane.b32.xlu0 %v1042, 64
    %v1045 = vpop.permute.xlu0 %1044
    %v1047 = vmul.f32 %v1026, %v1045
    %v1049 = vrot.slane %v1047, 6
    %1050 = vrot.lane.b32.xlu0 %v1049, 32
    %v1051 = vpop.permute.xlu0 %1050
    %v1052 = vsel %vm183, %v1051, 0
    %1054 = vmatpush.msra.mxu0 0.0
    %1055 = vmatpush.msra.mxu0 0.0
    %1056 = vmatpush.msra.mxu0 0.0
    %1057 = vmatpush.msra.mxu0 0.0
    %1058 = vmatpush.msra.mxu0 0.0
    %1059 = vmatpush.msra.mxu0 0.0
    %1060 = vmatpush.msra.mxu0 0.0
    %1061 = vmatpush.msra.mxu0 0.0
    %1062 = vmatpush.msra.mxu0 0.0
    %1063 = vmatpush.msra.mxu0 0.0
    %1064 = vmatpush.msra.mxu0 0.0
    %1065 = vmatpush.msra.mxu0 0.0
    %1066 = vmatpush.msra.mxu0 %v743
    %1067 = vmatpush.msra.mxu0 %v742
    %1068 = vmatpush.msra.mxu0 %v741
    %1069 = vmatpush.msra.mxu0 %v740
    %1070 = vmatmul.f32.gmra.mxu0 %v1052
    %v1071 = vpop.f32.mrf.mxu0
    %v1072 = vadd.f32 0.0, %v1071
    %1073 = vdwg.mxu0
    %v1074 = vadd.f32 %v779, %v1072
    %v1075 = vxor.u32 %v1074, 2147483648
    %v1076 = vmul.f32 %v1075, 1.442695
    %v1077 = vpow.pop %v1076
    %v1078 = vadd.f32 %v1077, 1.0
    %v1079 = vrcp.pop %v1078
    %v1080 = vmul.f32 %v1078, %v1079
    %v1081 = vsub.f32 1.0, %v1080
    %v1082 = vmul.f32 %v1079, %v1081
    %v1083 = vadd.f32 %v1079, %v1082
    %vm1084 = vweird.f32 %v1078
    %vm1085 = vweird.f32 %v1079
    %vm1086 = vmor %vm1084, %vm1085
    %v1087 = vsel %vm1086, %v1079, %v1083
    %v1088 = vand.u32 2147483647, %v1078
    %vm1089 = vcmp.eq.f32.partialorder %v1088, 8.507059e+37
    %v1090 = vand.u32 %v1078, 2147483648
    %v1091 = vor.u32 1.1754944e-38, %v1090
    %v1092 = vsel %vm1089, %v1091, %v1087
    %v1093 = vmul.f32 1.0, %v1092
    %v1094 = vtanh.pop %v1074
    %v1096 = vrot.slane %v1041, 6
    %v1098 = vmul.f32 %v1093, %v1096
    %1100 = vrot.lane.b32.xlu0 %v1094, 64
    %v1101 = vpop.permute.xlu0 %1100
    %v1103 = vmul.f32 %v1093, %v1101
    %1105 = vrot.lane.b32.xlu0 %v1103, 32
    %v1106 = vpop.permute.xlu0 %1105
    %v1108 = vadd.f32 %v1098, %v1106
    %v1109 = vtanh.pop %v1108
    %1111 = vrot.lane.b32.xlu0 %v1109, 64
    %v1112 = vpop.permute.xlu0 %1111
    %v1114 = vmul.f32 %v1093, %v1112
    %1116 = vrot.lane.b32.xlu0 %v1114, 32
    %v1117 = vpop.permute.xlu0 %1116
    %v1118 = vsel %vm183, %v1117, 0
    %1120 = vmatpush.msra.mxu0 0.0
    %1121 = vmatpush.msra.mxu0 0.0
    %1122 = vmatpush.msra.mxu0 0.0
    %1123 = vmatpush.msra.mxu0 0.0
    %1124 = vmatpush.msra.mxu0 0.0
    %1125 = vmatpush.msra.mxu0 0.0
    %1126 = vmatpush.msra.mxu0 0.0
    %1127 = vmatpush.msra.mxu0 0.0
    %1128 = vmatpush.msra.mxu0 0.0
    %1129 = vmatpush.msra.mxu0 0.0
    %1130 = vmatpush.msra.mxu0 0.0
    %1131 = vmatpush.msra.mxu0 0.0
    %1132 = vmatpush.msra.mxu0 %v743
    %1133 = vmatpush.msra.mxu0 %v742
    %1134 = vmatpush.msra.mxu0 %v741
    %1135 = vmatpush.msra.mxu0 %v740
    %1136 = vmatmul.f32.gmra.mxu0 %v1118
    %v1137 = vpop.f32.mrf.mxu0
    %v1138 = vadd.f32 0.0, %v1137
    %1139 = vdwg.mxu0
    %v1141 = vrot.slane %v1138, 6
    %v1143 = vadd.f32 %v779, %v1141
    %v1144 = vxor.u32 %v1143, 2147483648
    %v1145 = vmul.f32 %v1144, 1.442695
    %v1146 = vpow.pop %v1145
    %v1147 = vadd.f32 %v1146, 1.0
    %v1148 = vrcp.pop %v1147
    %v1149 = vmul.f32 %v1147, %v1148
    %v1150 = vsub.f32 1.0, %v1149
    %v1151 = vmul.f32 %v1148, %v1150
    %v1152 = vadd.f32 %v1148, %v1151
    %vm1153 = vweird.f32 %v1147
    %vm1154 = vweird.f32 %v1148
    %vm1155 = vmor %vm1153, %vm1154
    %v1156 = vsel %vm1155, %v1148, %v1152
    %v1157 = vand.u32 2147483647, %v1147
    %vm1158 = vcmp.eq.f32.partialorder %v1157, 8.507059e+37
    %v1159 = vand.u32 %v1147, 2147483648
    %v1160 = vor.u32 1.1754944e-38, %v1159
    %v1161 = vsel %vm1158, %v1160, %v1156
    %v1162 = vmul.f32 1.0, %v1161
    %v1163 = vtanh.pop %v1143
    %v1165 = vrot.slane %v1108, 6
    %v1167 = vmul.f32 %v1162, %v1165
    %1169 = vrot.lane.b32.xlu0 %v1163, 64
    %v1170 = vpop.permute.xlu0 %1169
    %v1172 = vmul.f32 %v1162, %v1170
    %1174 = vrot.lane.b32.xlu0 %v1172, 32
    %v1175 = vpop.permute.xlu0 %1174
    %v1177 = vadd.f32 %v1167, %v1175
    %v1178 = vtanh.pop %v1177
    %1180 = vrot.lane.b32.xlu0 %v1178, 64
    %v1181 = vpop.permute.xlu0 %1180
    %v1183 = vmul.f32 %v1162, %v1181
    %v1185 = vrot.slane %v1183, 2
    %1186 = vrot.lane.b32.xlu0 %v1185, 32
    %v1187 = vpop.permute.xlu0 %1186
    %v1188 = vsel %vm183, %v1187, 0
    %1190 = vmatpush.msra.mxu0 0.0
    %1191 = vmatpush.msra.mxu0 0.0
    %1192 = vmatpush.msra.mxu0 0.0
    %1193 = vmatpush.msra.mxu0 0.0
    %1194 = vmatpush.msra.mxu0 0.0
    %1195 = vmatpush.msra.mxu0 0.0
    %1196 = vmatpush.msra.mxu0 0.0
    %1197 = vmatpush.msra.mxu0 0.0
    %1198 = vmatpush.msra.mxu0 0.0
    %1199 = vmatpush.msra.mxu0 0.0
    %1200 = vmatpush.msra.mxu0 0.0
    %1201 = vmatpush.msra.mxu0 0.0
    %1202 = vmatpush.msra.mxu0 %v743
    %1203 = vmatpush.msra.mxu0 %v742
    %1204 = vmatpush.msra.mxu0 %v741
    %1205 = vmatpush.msra.mxu0 %v740
    %1206 = vmatmul.f32.gmra.mxu0 %v1188
    %v1207 = vpop.f32.mrf.mxu0
    %v1208 = vadd.f32 0.0, %v1207
    %1209 = vdwg.mxu0
    %v1211 = vrot.slane %v1208, 4
    %v1213 = vadd.f32 %v779, %v1211
    %v1214 = vxor.u32 %v1213, 2147483648
    %v1215 = vmul.f32 %v1214, 1.442695
    %v1216 = vpow.pop %v1215
    %v1217 = vadd.f32 %v1216, 1.0
    %v1218 = vrcp.pop %v1217
    %v1219 = vmul.f32 %v1217, %v1218
    %v1220 = vsub.f32 1.0, %v1219
    %v1221 = vmul.f32 %v1218, %v1220
    %v1222 = vadd.f32 %v1218, %v1221
    %vm1223 = vweird.f32 %v1217
    %vm1224 = vweird.f32 %v1218
    %vm1225 = vmor %vm1223, %vm1224
    %v1226 = vsel %vm1225, %v1218, %v1222
    %v1227 = vand.u32 2147483647, %v1217
    %vm1228 = vcmp.eq.f32.partialorder %v1227, 8.507059e+37
    %v1229 = vand.u32 %v1217, 2147483648
    %v1230 = vor.u32 1.1754944e-38, %v1229
    %v1231 = vsel %vm1228, %v1230, %v1226
    %v1232 = vmul.f32 1.0, %v1231
    %v1233 = vtanh.pop %v1213
    %v1235 = vrot.slane %v1177, 6
    %v1237 = vmul.f32 %v1232, %v1235
    %1239 = vrot.lane.b32.xlu0 %v1233, 64
    %v1240 = vpop.permute.xlu0 %1239
    %v1242 = vmul.f32 %v1232, %v1240
    %1244 = vrot.lane.b32.xlu0 %v1242, 32
    %v1245 = vpop.permute.xlu0 %1244
    %v1247 = vadd.f32 %v1237, %v1245
    %v1248 = vtanh.pop %v1247
    %1250 = vrot.lane.b32.xlu0 %v1248, 64
    %v1251 = vpop.permute.xlu0 %1250
    %v1253 = vmul.f32 %v1232, %v1251
    %v1255 = vrot.slane %v1253, 4
    %1256 = vrot.lane.b32.xlu0 %v1255, 32
    %v1257 = vpop.permute.xlu0 %1256
    %v1258 = vsel %vm183, %v1257, 0
    %1260 = vmatpush.msra.mxu0 0.0
    %1261 = vmatpush.msra.mxu0 0.0
    %1262 = vmatpush.msra.mxu0 0.0
    %1263 = vmatpush.msra.mxu0 0.0
    %1264 = vmatpush.msra.mxu0 0.0
    %1265 = vmatpush.msra.mxu0 0.0
    %1266 = vmatpush.msra.mxu0 0.0
    %1267 = vmatpush.msra.mxu0 0.0
    %1268 = vmatpush.msra.mxu0 0.0
    %1269 = vmatpush.msra.mxu0 0.0
    %1270 = vmatpush.msra.mxu0 0.0
    %1271 = vmatpush.msra.mxu0 0.0
    %1272 = vmatpush.msra.mxu0 %v743
    %1273 = vmatpush.msra.mxu0 %v742
    %1274 = vmatpush.msra.mxu0 %v741
    %1275 = vmatpush.msra.mxu0 %v740
    %1276 = vmatmul.f32.gmra.mxu0 %v1258
    %v1277 = vpop.f32.mrf.mxu0
    %v1278 = vadd.f32 0.0, %v1277
    %1279 = vdwg.mxu0
    %v1281 = vrot.slane %v1278, 2
    %v1283 = vadd.f32 %v779, %v1281
    %v1284 = vxor.u32 %v1283, 2147483648
    %v1285 = vmul.f32 %v1284, 1.442695
    %v1286 = vpow.pop %v1285
    %v1287 = vadd.f32 %v1286, 1.0
    %v1288 = vrcp.pop %v1287
    %v1289 = vmul.f32 %v1287, %v1288
    %v1290 = vsub.f32 1.0, %v1289
    %v1291 = vmul.f32 %v1288, %v1290
    %v1292 = vadd.f32 %v1288, %v1291
    %vm1293 = vweird.f32 %v1287
    %vm1294 = vweird.f32 %v1288
    %vm1295 = vmor %vm1293, %vm1294
    %v1296 = vsel %vm1295, %v1288, %v1292
    %v1297 = vand.u32 2147483647, %v1287
    %vm1298 = vcmp.eq.f32.partialorder %v1297, 8.507059e+37
    %v1299 = vand.u32 %v1287, 2147483648
    %v1300 = vor.u32 1.1754944e-38, %v1299
    %v1301 = vsel %vm1298, %v1300, %v1296
    %v1302 = vmul.f32 1.0, %v1301
    %v1303 = vtanh.pop %v1283
    %v1305 = vrot.slane %v1247, 6
    %v1307 = vmul.f32 %v1302, %v1305
    %1309 = vrot.lane.b32.xlu0 %v1303, 64
    %v1310 = vpop.permute.xlu0 %1309
    %v1312 = vmul.f32 %v1302, %v1310
    %1314 = vrot.lane.b32.xlu0 %v1312, 32
    %v1315 = vpop.permute.xlu0 %1314
    %v1317 = vadd.f32 %v1307, %v1315
    %v1318 = vtanh.pop %v1317
    %1320 = vrot.lane.b32.xlu0 %v1318, 64
    %v1321 = vpop.permute.xlu0 %1320
    %v1323 = vmul.f32 %v1302, %v1321
    %v1324 = vld [vmem:[%s7] sm:$0xff]
    %v1325 = vld [vmem:[%s7 + $0x8] sm:$0xff]
    %v1326 = vld [vmem:[%s7 + $0x10] sm:$0xff]
    %v1327 = vld [vmem:[%s7 + $0x18] sm:$0xff]
    %v1328 = vld [vmem:[#allocation2] sm:$0x1]
    %v1330 = vperm.slane %v1328, 0
    %v1333 = vrot.slane %v1323, 6
    %1334 = vrot.lane.b32.xlu0 %v1333, 32
    %v1335 = vpop.permute.xlu0 %1334
    %v1336 = vsel %vm183, %v1335, 0
    %1338 = vmatpush.msra.mxu0 0.0
    %1339 = vmatpush.msra.mxu0 0.0
    %1340 = vmatpush.msra.mxu0 0.0
    %1341 = vmatpush.msra.mxu0 0.0
    %1342 = vmatpush.msra.mxu0 0.0
    %1343 = vmatpush.msra.mxu0 0.0
    %1344 = vmatpush.msra.mxu0 0.0
    %1345 = vmatpush.msra.mxu0 0.0
    %1346 = vmatpush.msra.mxu0 0.0
    %1347 = vmatpush.msra.mxu0 0.0
    %1348 = vmatpush.msra.mxu0 0.0
    %1349 = vmatpush.msra.mxu0 0.0
    %1350 = vmatpush.msra.mxu0 %v1327
    %1351 = vmatpush.msra.mxu0 %v1326
    %1352 = vmatpush.msra.mxu0 %v1325
    %1353 = vmatpush.msra.mxu0 %v1324
    %1354 = vmatmul.f32.gmra.mxu0 %v1336
    %v1355 = vpop.f32.mrf.mxu0
    %v1356 = vadd.f32 %v1330, %v1355
    %1357 = vdwg.mxu0
    %vm1358 = vcmask 1024
    %1359 = vst.msk [vmem:[%s9] sm:$0x3] %vm1358, %v1356
    // Predicated region
    $region46: #{tpu_custom_call.1} parent=1 // pred_check
      _
    $region47: #{tpu_custom_call.1} parent=1 // pred_check_branch
      %1361 = sbr.rel (0) target = $region49
    $region48: #{tpu_custom_call.1} parent=1 // pred_region
      _
    $region49: #{tpu_custom_call.1} parent=1 // pred_fallthru
      _
    // Predicated region
    $region50: #{tpu_custom_call.1} parent=1 // pred_check
      _
    $region51: #{tpu_custom_call.1} parent=1 // pred_check_branch
      %1363 = sbr.rel (0) target = $region53
    $region52: #{tpu_custom_call.1} parent=1 // pred_region
      _
    $region53: #{tpu_custom_call.1} parent=1 // pred_fallthru
      _
    %1364 = vsyncpa [#allocation4], 1
    %1365 = vsyncpa [#allocation6], 1

</llo_original>
